<compile_context>
chip_gen: v7x
topology: tpu7x:2x2x1
jax: 0.10.0
libtpu: 0.0.40
codegen_flags: <defaults>
</compile_context>

<pallas_src>
import functools

import jax
import jax.numpy as jnp
from jax import lax
from jax.experimental import pallas as pl
from jax.experimental.pallas import tpu as pltpu


def bottleneck_kernel(x_ref, w1_ref, b1_ref, w2_ref, b2_ref, w3_ref, b3_ref,
                      out_ref, pad_ref, *, nb, h, w):
    # x_ref/out_ref: (nb*h*w, Cin) with Cin == 4*P (identity residual path)
    hw = h * w
    p = w1_ref.shape[1]

    x = x_ref[...]                                            # (nb*HW, Cin)

    # ---- conv1 (1x1, BN folded into weights) + relu --------------------
    out1 = jnp.dot(x, w1_ref[...], preferred_element_type=jnp.float32)
    out1 = jnp.maximum(out1 + b1_ref[...], 0.0)               # (nb*HW, P)

    # ---- conv2 (3x3, pad=1, stride=1, BN folded) + relu ----------------
    # Zero only the halo of the persistent padded scratch; the interior is
    # fully overwritten every step.
    zrow = jnp.zeros((nb, 1, w + 2, p), jnp.float32)
    zcol = jnp.zeros((nb, h, 1, p), jnp.float32)
    pad_ref[:, 0:1, :, :] = zrow
    pad_ref[:, h + 1:h + 2, :, :] = zrow
    pad_ref[:, 1:h + 1, 0:1, :] = zcol
    pad_ref[:, 1:h + 1, w + 1:w + 2, :] = zcol
    pad_ref[:, 1:h + 1, 1:w + 1, :] = out1.reshape(nb, h, w, p)

    # im2col: 9 shifted taps concatenated along the channel (lane) dim, then
    # one fused MXU matmul with the (9*P, P) conv2 weight.
    taps = [pad_ref[:, di:di + h, dj:dj + w, :].reshape(nb * hw, p)
            for di in range(3) for dj in range(3)]
    col = jnp.concatenate(taps, axis=-1)                      # (nb*HW, 9*P)
    out2 = jnp.dot(col, w2_ref[...], preferred_element_type=jnp.float32)
    out2 = jnp.maximum(out2 + b2_ref[...], 0.0)               # (nb*HW, P)

    # ---- conv3 (1x1, BN folded) + residual add + relu ------------------
    out3 = jnp.dot(out2, w3_ref[...], preferred_element_type=jnp.float32)
    out_ref[...] = jnp.maximum(out3 + b3_ref[...] + x, 0.0)   # (nb*HW, 4P)


def bottleneck_pallas(x_nhwc, w1, b1, w2, b2, w3, b3, *, nb=None):
    """x_nhwc: (N, H, W, Cin).  Weights already BN-folded:
       w1: (Cin, P), w2: (9*P, P) [HWIO flattened], w3: (P, 4*P); biases (1, C)."""
    N, H, W, Cin = x_nhwc.shape
    P = w1.shape[1]
    Cout = w3.shape[1]
    assert Cout == Cin, "identity residual requires inplanes == 4*planes"
    if nb is None:
        nb = N            # small shapes: one grid step, Nb*H*W matmul rows
    assert N % nb == 0
    HW = H * W

    # Lane-dense 2-D I/O: rows = pixels, lanes = channels (no in-kernel
    # reshapes of x/out; for real ResNet Cin>=128 this is fully lane-dense).
    x2d = x_nhwc.reshape(N * HW, Cin)

    full = lambda shape: pl.BlockSpec(shape, lambda n: (0,) * len(shape))
    kernel = functools.partial(bottleneck_kernel, nb=nb, h=H, w=W)

    out2d = pl.pallas_call(
        kernel,
        out_shape=jax.ShapeDtypeStruct((N * HW, Cout), jnp.float32),
        grid_spec=pltpu.PrefetchScalarGridSpec(
            num_scalar_prefetch=0,
            grid=(N // nb,),
            in_specs=[
                pl.BlockSpec((nb * HW, Cin), lambda n: (n, 0)),   # x
                full((Cin, P)), full((1, P)),                     # conv1 (+bn1)
                full((9 * P, P)), full((1, P)),                   # conv2 (+bn2)
                full((P, Cout)), full((1, Cout)),                 # conv3 (+bn3)
            ],
            out_specs=pl.BlockSpec((nb * HW, Cout), lambda n: (n, 0)),
            scratch_shapes=[pltpu.VMEM((nb, H + 2, W + 2, P), jnp.float32)],
        ),
        compiler_params=pltpu.CompilerParams(
            dimension_semantics=("parallel",)),
    )(x2d, w1, b1, w2, b2, w3, b3)

    return out2d.reshape(N, H, W, Cout)


# ---------------- pure-JAX reference (NCHW, like PyTorch) ----------------
def bn_eval(x, gamma, beta, mean, var, eps=1e-5):
    g = (gamma / jnp.sqrt(var + eps))[None, :, None, None]
    b = (beta - mean * gamma / jnp.sqrt(var + eps))[None, :, None, None]
    return x * g + b


def ref_bottleneck(x, p):
    dn = ("NCHW", "OIHW", "NCHW")
    out = lax.conv_general_dilated(x, p["w1"], (1, 1), "VALID",
                                   dimension_numbers=dn)
    out = jax.nn.relu(bn_eval(out, *p["bn1"]))
    out = lax.conv_general_dilated(out, p["w2"], (1, 1), ((1, 1), (1, 1)),
                                   dimension_numbers=dn)
    out = jax.nn.relu(bn_eval(out, *p["bn2"]))
    out = lax.conv_general_dilated(out, p["w3"], (1, 1), "VALID",
                                   dimension_numbers=dn)
    out = bn_eval(out, *p["bn3"])
    return jax.nn.relu(out + x)


if __name__ == "__main__":
    # Small shapes: planes=8, inplanes=4*planes=32 (downsample=None requires this)
    N, planes, H, W = 2, 8, 8, 8
    inplanes = planes * 4

    key = jax.random.PRNGKey(0)
    ks = jax.random.split(key, 16)

    # PyTorch-style OIHW conv weights (bias=False)
    w1_oihw = jax.random.normal(ks[0], (planes, inplanes, 1, 1), jnp.float32) * 0.1
    w2_oihw = jax.random.normal(ks[1], (planes, planes, 3, 3), jnp.float32) * 0.1
    w3_oihw = jax.random.normal(ks[2], (planes * 4, planes, 1, 1), jnp.float32) * 0.1

    def bn_params(k, c):
        k1, k2, k3, k4 = jax.random.split(k, 4)
        gamma = jax.random.uniform(k1, (c,), jnp.float32, 0.5, 1.5)
        beta = jax.random.normal(k2, (c,), jnp.float32) * 0.1
        mean = jax.random.normal(k3, (c,), jnp.float32) * 0.1
        var = jax.random.uniform(k4, (c,), jnp.float32, 0.5, 1.5)
        return gamma, beta, mean, var

    bn1 = bn_params(ks[3], planes)
    bn2 = bn_params(ks[4], planes)
    bn3 = bn_params(ks[5], planes * 4)

    x_nchw = jax.random.normal(ks[6], (N, inplanes, H, W), jnp.float32)

    # ---- host-side param prep: fold BN scale into weights, keep bias ----
    eps = 1e-5

    def fold(gamma, beta, mean, var):
        s = gamma / jnp.sqrt(var + eps)
        b = beta - mean * s
        return s[None, :], b[None, :]                         # (1, C)

    s1, b1 = fold(*bn1)
    s2, b2 = fold(*bn2)
    s3, b3 = fold(*bn3)

    w1_k = jnp.transpose(w1_oihw[:, :, 0, 0], (1, 0)) * s1              # (Cin, P)
    w2_k = (jnp.transpose(w2_oihw, (2, 3, 1, 0))                        # HWIO
            .reshape(9 * planes, planes)) * s2                          # (9P, P)
    w3_k = jnp.transpose(w3_oihw[:, :, 0, 0], (1, 0)) * s3              # (P, 4P)

    x_nhwc = jnp.transpose(x_nchw, (0, 2, 3, 1))

    out_nhwc = bottleneck_pallas(x_nhwc, w1_k, b1, w2_k, b2, w3_k, b3, nb=N)
    out_nhwc = jax.block_until_ready(out_nhwc)
    out_nchw = jnp.transpose(out_nhwc, (0, 3, 1, 2))

    ref = ref_bottleneck(x_nchw, {"w1": w1_oihw, "w2": w2_oihw, "w3": w3_oihw,
                                  "bn1": bn1, "bn2": bn2, "bn3": bn3})
    ref = jax.block_until_ready(ref)

    assert out_nchw.shape == (N, inplanes, H, W)
    assert jnp.allclose(out_nchw, ref, atol=1e-4, rtol=1e-4), (
        float(jnp.max(jnp.abs(out_nchw - ref))))
    print("KERNEL_OK")
</pallas_src>

<mosaic_0001>
module attributes {stable_mosaic.version = 11 : i64} {
  func.func @bottleneck_kernel(%arg0: i32, %arg1: memref<128x32xf32, #tpu.memory_space<vmem>>, %arg2: memref<32x8xf32, #tpu.memory_space<vmem>>, %arg3: memref<1x8xf32, #tpu.memory_space<vmem>>, %arg4: memref<72x8xf32, #tpu.memory_space<vmem>>, %arg5: memref<1x8xf32, #tpu.memory_space<vmem>>, %arg6: memref<8x32xf32, #tpu.memory_space<vmem>>, %arg7: memref<1x32xf32, #tpu.memory_space<vmem>>, %arg8: memref<128x32xf32, #tpu.memory_space<vmem>>, %arg9: memref<2x10x10x8xf32, #tpu.memory_space<vmem>>) attributes {dimension_semantics = [#tpu.dimension_semantics<parallel>], iteration_bounds = array<i64: 1>, scalar_prefetch = 0 : i64, scratch_operands = 1 : i64, tpu.core_type = #tpu.core_type<tc>, window_params = [{transform_indices = @transform_0, window_bounds = array<i64: 128, 32>}, {pipeline_mode = #tpu.pipeline_mode<synchronous>, transform_indices = @transform_1, window_bounds = array<i64: 32, 8>}, {pipeline_mode = #tpu.pipeline_mode<synchronous>, transform_indices = @transform_2, window_bounds = array<i64: 1, 8>}, {pipeline_mode = #tpu.pipeline_mode<synchronous>, transform_indices = @transform_3, window_bounds = array<i64: 72, 8>}, {pipeline_mode = #tpu.pipeline_mode<synchronous>, transform_indices = @transform_4, window_bounds = array<i64: 1, 8>}, {pipeline_mode = #tpu.pipeline_mode<synchronous>, transform_indices = @transform_5, window_bounds = array<i64: 8, 32>}, {pipeline_mode = #tpu.pipeline_mode<synchronous>, transform_indices = @transform_6, window_bounds = array<i64: 1, 32>}, {transform_indices = @transform_7, window_bounds = array<i64: 128, 32>}]} {
    %c0 = arith.constant 0 : index
    %c0_0 = arith.constant 0 : index
    %0 = vector.load %arg1[%c0, %c0_0] : memref<128x32xf32, #tpu.memory_space<vmem>>, vector<128x32xf32>
    %c0_1 = arith.constant 0 : index
    %c0_2 = arith.constant 0 : index
    %1 = vector.load %arg2[%c0_1, %c0_2] : memref<32x8xf32, #tpu.memory_space<vmem>>, vector<32x8xf32>
    %cst = arith.constant dense<0.000000e+00> : vector<128x8xf32>
    %2 = tpu.matmul %0, %1, %cst {dimension_numbers = #tpu.dot_dimension_numbers<[1], [0], [0], [1], [0, 0, 1, 1], [], []>} : vector<128x32xf32>, vector<32x8xf32>, vector<128x8xf32> -> vector<128x8xf32>
    %c0_3 = arith.constant 0 : index
    %c0_4 = arith.constant 0 : index
    %3 = vector.load %arg3[%c0_3, %c0_4] : memref<1x8xf32, #tpu.memory_space<vmem>>, vector<1x8xf32>
    %4 = vector.broadcast %3 : vector<1x8xf32> to vector<128x8xf32>
    %5 = arith.addf %2, %4 : vector<128x8xf32>
    %cst_5 = arith.constant 0.000000e+00 : f32
    %6 = vector.broadcast %cst_5 : f32 to vector<128x8xf32>
    %7 = arith.maximumf %5, %6 : vector<128x8xf32>
    %cst_6 = arith.constant 0.000000e+00 : f32
    %8 = vector.broadcast %cst_6 : f32 to vector<2x1x10x8xf32>
    %cst_7 = arith.constant 0.000000e+00 : f32
    %9 = vector.broadcast %cst_7 : f32 to vector<2x8x1x8xf32>
    %c0_8 = arith.constant 0 : index
    %c0_9 = arith.constant 0 : index
    %c0_10 = arith.constant 0 : index
    %c0_11 = arith.constant 0 : index
    %10 = vector.load %arg9[%c0_8, %c0_9, %c0_10, %c0_11] : memref<2x10x10x8xf32, #tpu.memory_space<vmem>>, vector<2x1x10x8xf32>
    tpu.vector_store %arg9[%c0_8, %c0_9, %c0_10, %c0_11], %8 {strides = array<i32>} : memref<2x10x10x8xf32, #tpu.memory_space<vmem>>, vector<2x1x10x8xf32>,
    %c0_12 = arith.constant 0 : index
    %c9 = arith.constant 9 : index
    %c0_13 = arith.constant 0 : index
    %c0_14 = arith.constant 0 : index
    %11 = vector.load %arg9[%c0_12, %c9, %c0_13, %c0_14] : memref<2x10x10x8xf32, #tpu.memory_space<vmem>>, vector<2x1x10x8xf32>
    tpu.vector_store %arg9[%c0_12, %c9, %c0_13, %c0_14], %8 {strides = array<i32>} : memref<2x10x10x8xf32, #tpu.memory_space<vmem>>, vector<2x1x10x8xf32>,
    %c0_15 = arith.constant 0 : index
    %c1 = arith.constant 1 : index
    %c0_16 = arith.constant 0 : index
    %c0_17 = arith.constant 0 : index
    %12 = vector.load %arg9[%c0_15, %c1, %c0_16, %c0_17] : memref<2x10x10x8xf32, #tpu.memory_space<vmem>>, vector<2x8x1x8xf32>
    tpu.vector_store %arg9[%c0_15, %c1, %c0_16, %c0_17], %9 {strides = array<i32>} : memref<2x10x10x8xf32, #tpu.memory_space<vmem>>, vector<2x8x1x8xf32>,
    %c0_18 = arith.constant 0 : index
    %c1_19 = arith.constant 1 : index
    %c9_20 = arith.constant 9 : index
    %c0_21 = arith.constant 0 : index
    %13 = vector.load %arg9[%c0_18, %c1_19, %c9_20, %c0_21] : memref<2x10x10x8xf32, #tpu.memory_space<vmem>>, vector<2x8x1x8xf32>
    tpu.vector_store %arg9[%c0_18, %c1_19, %c9_20, %c0_21], %9 {strides = array<i32>} : memref<2x10x10x8xf32, #tpu.memory_space<vmem>>, vector<2x8x1x8xf32>,
    %14 = vector.shape_cast %7 : vector<128x8xf32> to vector<2x8x8x8xf32>
    %c0_22 = arith.constant 0 : index
    %c1_23 = arith.constant 1 : index
    %c1_24 = arith.constant 1 : index
    %c0_25 = arith.constant 0 : index
    %15 = vector.load %arg9[%c0_22, %c1_23, %c1_24, %c0_25] : memref<2x10x10x8xf32, #tpu.memory_space<vmem>>, vector<2x8x8x8xf32>
    tpu.vector_store %arg9[%c0_22, %c1_23, %c1_24, %c0_25], %14 {strides = array<i32>} : memref<2x10x10x8xf32, #tpu.memory_space<vmem>>, vector<2x8x8x8xf32>,
    %c0_26 = arith.constant 0 : index
    %c0_27 = arith.constant 0 : index
    %c0_28 = arith.constant 0 : index
    %c0_29 = arith.constant 0 : index
    %16 = vector.load %arg9[%c0_26, %c0_27, %c0_28, %c0_29] : memref<2x10x10x8xf32, #tpu.memory_space<vmem>>, vector<2x8x8x8xf32>
    %17 = vector.shape_cast %16 : vector<2x8x8x8xf32> to vector<128x8xf32>
    %c0_30 = arith.constant 0 : index
    %c0_31 = arith.constant 0 : index
    %c1_32 = arith.constant 1 : index
    %c0_33 = arith.constant 0 : index
    %18 = vector.load %arg9[%c0_30, %c0_31, %c1_32, %c0_33] : memref<2x10x10x8xf32, #tpu.memory_space<vmem>>, vector<2x8x8x8xf32>
    %19 = vector.shape_cast %18 : vector<2x8x8x8xf32> to vector<128x8xf32>
    %c0_34 = arith.constant 0 : index
    %c0_35 = arith.constant 0 : index
    %c2 = arith.constant 2 : index
    %c0_36 = arith.constant 0 : index
    %20 = vector.load %arg9[%c0_34, %c0_35, %c2, %c0_36] : memref<2x10x10x8xf32, #tpu.memory_space<vmem>>, vector<2x8x8x8xf32>
    %21 = vector.shape_cast %20 : vector<2x8x8x8xf32> to vector<128x8xf32>
    %c0_37 = arith.constant 0 : index
    %c1_38 = arith.constant 1 : index
    %c0_39 = arith.constant 0 : index
    %c0_40 = arith.constant 0 : index
    %22 = vector.load %arg9[%c0_37, %c1_38, %c0_39, %c0_40] : memref<2x10x10x8xf32, #tpu.memory_space<vmem>>, vector<2x8x8x8xf32>
    %23 = vector.shape_cast %22 : vector<2x8x8x8xf32> to vector<128x8xf32>
    %c0_41 = arith.constant 0 : index
    %c1_42 = arith.constant 1 : index
    %c1_43 = arith.constant 1 : index
    %c0_44 = arith.constant 0 : index
    %24 = vector.load %arg9[%c0_41, %c1_42, %c1_43, %c0_44] : memref<2x10x10x8xf32, #tpu.memory_space<vmem>>, vector<2x8x8x8xf32>
    %25 = vector.shape_cast %24 : vector<2x8x8x8xf32> to vector<128x8xf32>
    %c0_45 = arith.constant 0 : index
    %c1_46 = arith.constant 1 : index
    %c2_47 = arith.constant 2 : index
    %c0_48 = arith.constant 0 : index
    %26 = vector.load %arg9[%c0_45, %c1_46, %c2_47, %c0_48] : memref<2x10x10x8xf32, #tpu.memory_space<vmem>>, vector<2x8x8x8xf32>
    %27 = vector.shape_cast %26 : vector<2x8x8x8xf32> to vector<128x8xf32>
    %c0_49 = arith.constant 0 : index
    %c2_50 = arith.constant 2 : index
    %c0_51 = arith.constant 0 : index
    %c0_52 = arith.constant 0 : index
    %28 = vector.load %arg9[%c0_49, %c2_50, %c0_51, %c0_52] : memref<2x10x10x8xf32, #tpu.memory_space<vmem>>, vector<2x8x8x8xf32>
    %29 = vector.shape_cast %28 : vector<2x8x8x8xf32> to vector<128x8xf32>
    %c0_53 = arith.constant 0 : index
    %c2_54 = arith.constant 2 : index
    %c1_55 = arith.constant 1 : index
    %c0_56 = arith.constant 0 : index
    %30 = vector.load %arg9[%c0_53, %c2_54, %c1_55, %c0_56] : memref<2x10x10x8xf32, #tpu.memory_space<vmem>>, vector<2x8x8x8xf32>
    %31 = vector.shape_cast %30 : vector<2x8x8x8xf32> to vector<128x8xf32>
    %c0_57 = arith.constant 0 : index
    %c2_58 = arith.constant 2 : index
    %c2_59 = arith.constant 2 : index
    %c0_60 = arith.constant 0 : index
    %32 = vector.load %arg9[%c0_57, %c2_58, %c2_59, %c0_60] : memref<2x10x10x8xf32, #tpu.memory_space<vmem>>, vector<2x8x8x8xf32>
    %33 = vector.shape_cast %32 : vector<2x8x8x8xf32> to vector<128x8xf32>
    %34 = tpu.concatenate %17, %19, %21, %23, %25, %27, %29, %31, %33 in 1 : vector<128x8xf32>, vector<128x8xf32>, vector<128x8xf32>, vector<128x8xf32>, vector<128x8xf32>, vector<128x8xf32>, vector<128x8xf32>, vector<128x8xf32>, vector<128x8xf32> -> vector<128x72xf32>
    %c0_61 = arith.constant 0 : index
    %c0_62 = arith.constant 0 : index
    %35 = vector.load %arg4[%c0_61, %c0_62] : memref<72x8xf32, #tpu.memory_space<vmem>>, vector<72x8xf32>
    %cst_63 = arith.constant dense<0.000000e+00> : vector<128x8xf32>
    %36 = tpu.matmul %34, %35, %cst_63 {dimension_numbers = #tpu.dot_dimension_numbers<[1], [0], [0], [1], [0, 0, 1, 1], [], []>} : vector<128x72xf32>, vector<72x8xf32>, vector<128x8xf32> -> vector<128x8xf32>
    %c0_64 = arith.constant 0 : index
    %c0_65 = arith.constant 0 : index
    %37 = vector.load %arg5[%c0_64, %c0_65] : memref<1x8xf32, #tpu.memory_space<vmem>>, vector<1x8xf32>
    %38 = vector.broadcast %37 : vector<1x8xf32> to vector<128x8xf32>
    %39 = arith.addf %36, %38 : vector<128x8xf32>
    %cst_66 = arith.constant 0.000000e+00 : f32
    %40 = vector.broadcast %cst_66 : f32 to vector<128x8xf32>
    %41 = arith.maximumf %39, %40 : vector<128x8xf32>
    %c0_67 = arith.constant 0 : index
    %c0_68 = arith.constant 0 : index
    %42 = vector.load %arg6[%c0_67, %c0_68] : memref<8x32xf32, #tpu.memory_space<vmem>>, vector<8x32xf32>
    %cst_69 = arith.constant dense<0.000000e+00> : vector<128x32xf32>
    %43 = tpu.matmul %41, %42, %cst_69 {dimension_numbers = #tpu.dot_dimension_numbers<[1], [0], [0], [1], [0, 0, 1, 1], [], []>} : vector<128x8xf32>, vector<8x32xf32>, vector<128x32xf32> -> vector<128x32xf32>
    %c0_70 = arith.constant 0 : index
    %c0_71 = arith.constant 0 : index
    %44 = vector.load %arg7[%c0_70, %c0_71] : memref<1x32xf32, #tpu.memory_space<vmem>>, vector<1x32xf32>
    %45 = vector.broadcast %44 : vector<1x32xf32> to vector<128x32xf32>
    %46 = arith.addf %43, %45 : vector<128x32xf32>
    %47 = arith.addf %46, %0 : vector<128x32xf32>
    %cst_72 = arith.constant 0.000000e+00 : f32
    %48 = vector.broadcast %cst_72 : f32 to vector<128x32xf32>
    %49 = arith.maximumf %47, %48 : vector<128x32xf32>
    %c0_73 = arith.constant 0 : index
    %c0_74 = arith.constant 0 : index
    %50 = vector.load %arg8[%c0_73, %c0_74] : memref<128x32xf32, #tpu.memory_space<vmem>>, vector<128x32xf32>
    tpu.vector_store %arg8[%c0_73, %c0_74], %49 {strides = array<i32>} : memref<128x32xf32, #tpu.memory_space<vmem>>, vector<128x32xf32>,
    return
  }
  func.func @transform_0(%arg0: i32) -> (i32, i32) {
    %c0_i32 = arith.constant 0 : i32
    %c0_i32_0 = arith.constant 0 : i32
    return %arg0, %c0_i32 : i32, i32
  }
  func.func @transform_1(%arg0: i32) -> (i32, i32) {
    %c0_i32 = arith.constant 0 : i32
    %c0_i32_0 = arith.constant 0 : i32
    %c0_i32_1 = arith.constant 0 : i32
    return %c0_i32, %c0_i32_0 : i32, i32
  }
  func.func @transform_2(%arg0: i32) -> (i32, i32) {
    %c0_i32 = arith.constant 0 : i32
    %c0_i32_0 = arith.constant 0 : i32
    %c0_i32_1 = arith.constant 0 : i32
    return %c0_i32, %c0_i32_0 : i32, i32
  }
  func.func @transform_3(%arg0: i32) -> (i32, i32) {
    %c0_i32 = arith.constant 0 : i32
    %c0_i32_0 = arith.constant 0 : i32
    %c0_i32_1 = arith.constant 0 : i32
    return %c0_i32, %c0_i32_0 : i32, i32
  }
  func.func @transform_4(%arg0: i32) -> (i32, i32) {
    %c0_i32 = arith.constant 0 : i32
    %c0_i32_0 = arith.constant 0 : i32
    %c0_i32_1 = arith.constant 0 : i32
    return %c0_i32, %c0_i32_0 : i32, i32
  }
  func.func @transform_5(%arg0: i32) -> (i32, i32) {
    %c0_i32 = arith.constant 0 : i32
    %c0_i32_0 = arith.constant 0 : i32
    %c0_i32_1 = arith.constant 0 : i32
    return %c0_i32, %c0_i32_0 : i32, i32
  }
  func.func @transform_6(%arg0: i32) -> (i32, i32) {
    %c0_i32 = arith.constant 0 : i32
    %c0_i32_0 = arith.constant 0 : i32
    %c0_i32_1 = arith.constant 0 : i32
    return %c0_i32, %c0_i32_0 : i32, i32
  }
  func.func @transform_7(%arg0: i32) -> (i32, i32) {
    %c0_i32 = arith.constant 0 : i32
    %c0_i32_0 = arith.constant 0 : i32
    return %arg0, %c0_i32 : i32, i32
  }
}

</mosaic_0001>

<llo_original>
// kernel: tpu_custom_call.1
$region0: #{tpu_custom_call.1}
  #allocation0 [shape = 'u32[]', space=smem, size = 0x4, offset = 0x4, fixed_abs, tag = 'smem constant byte address 0x4 - core index']
  #allocation1 [shape = 'u32[144,128]{1,0:T(1,128)}', space=vmem, size = 0x12000, scoped, tag = 'internal scratch']
  #allocation2 [shape = 'f32[2,10,10,8]{3,2,1,0:T(8,128)}', space=vmem, size = 0x28000, scoped, tag = 'scratch operand']
  %s0 = inlined_call_operand.vmem [shape: f32[128,32], index: 0, kind: input, shape index: {}]
  %s1 = inlined_call_operand.vmem [shape: f32[32,8], index: 1, kind: input, shape index: {}]
  %s2 = inlined_call_operand.vmem [shape: f32[1,8], index: 2, kind: input, shape index: {}]
  %s3 = inlined_call_operand.vmem [shape: f32[72,8], index: 3, kind: input, shape index: {}]
  %s4 = inlined_call_operand.vmem [shape: f32[1,8], index: 4, kind: input, shape index: {}]
  %s5 = inlined_call_operand.vmem [shape: f32[8,32], index: 5, kind: input, shape index: {}]
  %s6 = inlined_call_operand.vmem [shape: f32[1,32], index: 6, kind: input, shape index: {}]
  %s7 = inlined_call_operand.vmem [shape: f32[128,32], index: 7, kind: output, shape index: {}]
  %s8 = sld [smem:[#allocation0]]
  $region38: #{tpu_custom_call.1} parent=0
    _
  %s10 = ssub.s32 1, %s8
  %s11 = scalar_select 0, %s10, %s8
  // Predicated region
  $region2: #{tpu_custom_call.1} parent=0 // pred_check
    _
  $region3: #{tpu_custom_call.1} parent=0 // pred_check_branch
    %13 = sbr.rel (0) target = $region5
  $region4: #{tpu_custom_call.1} parent=0 // pred_region
    _
  $region5: #{tpu_custom_call.1} parent=0 // pred_fallthru
    _
  // Predicated region
  $region6: #{tpu_custom_call.1} parent=0 // pred_check
    _
  $region7: #{tpu_custom_call.1} parent=0 // pred_check_branch
    %15 = sbr.rel (0) target = $region9
  $region8: #{tpu_custom_call.1} parent=0 // pred_region
    _
  $region9: #{tpu_custom_call.1} parent=0 // pred_fallthru
    _
  // Predicated region
  $region10: #{tpu_custom_call.1} parent=0 // pred_check
    _
  $region11: #{tpu_custom_call.1} parent=0 // pred_check_branch
    %17 = sbr.rel (0) target = $region13
  $region12: #{tpu_custom_call.1} parent=0 // pred_region
    _
  $region13: #{tpu_custom_call.1} parent=0 // pred_fallthru
    _
  // Predicated region
  $region14: #{tpu_custom_call.1} parent=0 // pred_check
    _
  $region15: #{tpu_custom_call.1} parent=0 // pred_check_branch
    %19 = sbr.rel (0) target = $region17
  $region16: #{tpu_custom_call.1} parent=0 // pred_region
    _
  $region17: #{tpu_custom_call.1} parent=0 // pred_fallthru
    _
  // Predicated region
  $region18: #{tpu_custom_call.1} parent=0 // pred_check
    _
  $region19: #{tpu_custom_call.1} parent=0 // pred_check_branch
    %21 = sbr.rel (0) target = $region21
  $region20: #{tpu_custom_call.1} parent=0 // pred_region
    _
  $region21: #{tpu_custom_call.1} parent=0 // pred_fallthru
    _
  // Predicated region
  $region22: #{tpu_custom_call.1} parent=0 // pred_check
    _
  $region23: #{tpu_custom_call.1} parent=0 // pred_check_branch
    %23 = sbr.rel (0) target = $region25
  $region24: #{tpu_custom_call.1} parent=0 // pred_region
    _
  $region25: #{tpu_custom_call.1} parent=0 // pred_fallthru
    _
  // Predicated region
  $region26: #{tpu_custom_call.1} parent=0 // pred_check
    _
  $region27: #{tpu_custom_call.1} parent=0 // pred_check_branch
    %25 = sbr.rel (0) target = $region29
  $region28: #{tpu_custom_call.1} parent=0 // pred_region
    _
  $region29: #{tpu_custom_call.1} parent=0 // pred_fallthru
    _
  %v26 = vld [vmem:[%s0] sm:$0xff]
  %v27 = vld [vmem:[%s0 + $0x8] sm:$0xff]
  %v28 = vld [vmem:[%s0 + $0x10] sm:$0xff]
  %v29 = vld [vmem:[%s0 + $0x18] sm:$0xff]
  %v30 = vld [vmem:[%s0 + $0x20] sm:$0xff]
  %v31 = vld [vmem:[%s0 + $0x28] sm:$0xff]
  %v32 = vld [vmem:[%s0 + $0x30] sm:$0xff]
  %v33 = vld [vmem:[%s0 + $0x38] sm:$0xff]
  %v34 = vld [vmem:[%s0 + $0x40] sm:$0xff]
  %v35 = vld [vmem:[%s0 + $0x48] sm:$0xff]
  %v36 = vld [vmem:[%s0 + $0x50] sm:$0xff]
  %v37 = vld [vmem:[%s0 + $0x58] sm:$0xff]
  %v38 = vld [vmem:[%s0 + $0x60] sm:$0xff]
  %v39 = vld [vmem:[%s0 + $0x68] sm:$0xff]
  %v40 = vld [vmem:[%s0 + $0x70] sm:$0xff]
  %v41 = vld [vmem:[%s0 + $0x78] sm:$0xff]
  %v42 = vld [vmem:[%s1] sm:$0xff]
  %v43 = vld [vmem:[%s1 + $0x8] sm:$0xff]
  %v44 = vld [vmem:[%s1 + $0x10] sm:$0xff]
  %v45 = vld [vmem:[%s1 + $0x18] sm:$0xff]
  %v46 = vld [vmem:[%s2] sm:$0x1]
  %v48 = vlaneseq
  %v49 = vshrl.u32 %v48, 7
  %v50 = vsub.s32 0, %v49
  %v51 = vrot.slane %v46, %v50
  %vm53 = vcmask 261120
  %v55 = vsel %vm53, %v26, 0
  %v58 = vsel %vm53, %v27, 0
  %v61 = vsel %vm53, %v28, 0
  %v64 = vsel %vm53, %v29, 0
  %v67 = vsel %vm53, %v30, 0
  %v70 = vsel %vm53, %v31, 0
  %v73 = vsel %vm53, %v32, 0
  %v76 = vsel %vm53, %v33, 0
  %v79 = vsel %vm53, %v34, 0
  %v82 = vsel %vm53, %v35, 0
  %v85 = vsel %vm53, %v36, 0
  %v88 = vsel %vm53, %v37, 0
  %v91 = vsel %vm53, %v38, 0
  %v94 = vsel %vm53, %v39, 0
  %v97 = vsel %vm53, %v40, 0
  %v100 = vsel %vm53, %v41, 0
  %102 = vmatprep.subr.mxu0 0.0
  %103 = vmatpush1.msra.mxu0 %v42
  %104 = vmatprep.subr.mxu0 0.0
  %105 = vmatpush1.msra.mxu0 %v43
  %106 = vmatprep.subr.mxu0 0.0
  %107 = vmatpush1.msra.mxu0 %v44
  %108 = vmatprep.subr.mxu0 0.0
  %109 = vmatpush1.msra.mxu0 %v45
  %110 = vmatprep.subr.mxu0 0.0
  %111 = vmatpush1.msra.mxu0 0.0
  %112 = vmatprep.subr.mxu0 0.0
  %113 = vmatpush1.msra.mxu0 0.0
  %114 = vmatprep.subr.mxu0 0.0
  %115 = vmatpush1.msra.mxu0 0.0
  %116 = vmatprep.subr.mxu0 0.0
  %117 = vmatpush1.msra.mxu0 0.0
  %118 = vmatprep.subr.mxu0 0.0
  %119 = vmatpush1.msra.mxu0 0.0
  %120 = vmatprep.subr.mxu0 0.0
  %121 = vmatpush1.msra.mxu0 0.0
  %122 = vmatprep.subr.mxu0 0.0
  %123 = vmatpush1.msra.mxu0 0.0
  %124 = vmatprep.subr.mxu0 0.0
  %125 = vmatpush1.msra.mxu0 0.0
  %126 = vmatprep.subr.mxu0 0.0
  %127 = vmatpush1.msra.mxu0 0.0
  %128 = vmatprep.subr.mxu0 0.0
  %129 = vmatpush1.msra.mxu0 0.0
  %130 = vmatprep.subr.mxu0 0.0
  %131 = vmatpush1.msra.mxu0 0.0
  %132 = vmatprep.subr.mxu0 0.0
  %133 = vmatpush1.msra.mxu0 0.0
  %134 = vmatprep.subr.mxu0 0.0
  %135 = vmatpush1.msra.mxu0 0.0
  %136 = vmatprep.subr.mxu0 0.0
  %137 = vmatpush1.msra.mxu0 0.0
  %138 = vmatprep.subr.mxu0 0.0
  %139 = vmatpush1.msra.mxu0 0.0
  %140 = vmatprep.subr.mxu0 0.0
  %141 = vmatpush1.msra.mxu0 0.0
  %142 = vmatprep.subr.mxu0 0.0
  %143 = vmatpush1.msra.mxu0 0.0
  %144 = vmatprep.subr.mxu0 0.0
  %145 = vmatpush1.msra.mxu0 0.0
  %146 = vmatprep.subr.mxu0 0.0
  %147 = vmatpush1.msra.mxu0 0.0
  %148 = vmatprep.subr.mxu0 0.0
  %149 = vmatpush1.msra.mxu0 0.0
  %150 = vmatprep.subr.mxu0 0.0
  %151 = vmatpush1.msra.mxu0 0.0
  %152 = vmatprep.subr.mxu0 0.0
  %153 = vmatpush1.msra.mxu0 0.0
  %154 = vmatprep.subr.mxu0 0.0
  %155 = vmatpush1.msra.mxu0 0.0
  %156 = vmatprep.subr.mxu0 0.0
  %157 = vmatpush1.msra.mxu0 0.0
  %158 = vmatprep.subr.mxu0 0.0
  %159 = vmatpush1.msra.mxu0 0.0
  %160 = vmatprep.subr.mxu0 0.0
  %161 = vmatpush1.msra.mxu0 0.0
  %162 = vmatprep.subr.mxu0 0.0
  %163 = vmatpush1.msra.mxu0 0.0
  %164 = vmatprep.subr.mxu0 0.0
  %165 = vmatpush1.msra.mxu0 0.0
  %166 = vmatprep.mubr.f32.mxu0 0.0
  %167 = vmatmul.mubr.f32.gmra.mrb[0].mxu0 %v55
  %v168 = vpop.f32.mrb[0].mxu0
  %v169 = vadd.f32 %v51, %v168
  %v170 = vpop.f32.mrb[0].mxu0
  %171 = vmatprep.mubr.f32.mxu0 0.0
  %172 = vmatmul.mubr.f32.gmra.mrb[0].mxu0 %v58
  %v173 = vpop.f32.mrb[0].mxu0
  %v174 = vadd.f32 %v51, %v173
  %v175 = vpop.f32.mrb[0].mxu0
  %176 = vmatprep.mubr.f32.mxu0 0.0
  %177 = vmatmul.mubr.f32.gmra.mrb[0].mxu0 %v61
  %v178 = vpop.f32.mrb[0].mxu0
  %v179 = vadd.f32 %v51, %v178
  %v180 = vpop.f32.mrb[0].mxu0
  %181 = vmatprep.mubr.f32.mxu0 0.0
  %182 = vmatmul.mubr.f32.gmra.mrb[0].mxu0 %v64
  %v183 = vpop.f32.mrb[0].mxu0
  %v184 = vadd.f32 %v51, %v183
  %v185 = vpop.f32.mrb[0].mxu0
  %186 = vmatprep.mubr.f32.mxu0 0.0
  %187 = vmatmul.mubr.f32.gmra.mrb[0].mxu0 %v67
  %v188 = vpop.f32.mrb[0].mxu0
  %v189 = vadd.f32 %v51, %v188
  %v190 = vpop.f32.mrb[0].mxu0
  %191 = vmatprep.mubr.f32.mxu0 0.0
  %192 = vmatmul.mubr.f32.gmra.mrb[0].mxu0 %v70
  %v193 = vpop.f32.mrb[0].mxu0
  %v194 = vadd.f32 %v51, %v193
  %v195 = vpop.f32.mrb[0].mxu0
  %196 = vmatprep.mubr.f32.mxu0 0.0
  %197 = vmatmul.mubr.f32.gmra.mrb[0].mxu0 %v73
  %v198 = vpop.f32.mrb[0].mxu0
  %v199 = vadd.f32 %v51, %v198
  %v200 = vpop.f32.mrb[0].mxu0
  %201 = vmatprep.mubr.f32.mxu0 0.0
  %202 = vmatmul.mubr.f32.gmra.mrb[0].mxu0 %v76
  %v203 = vpop.f32.mrb[0].mxu0
  %v204 = vadd.f32 %v51, %v203
  %v205 = vpop.f32.mrb[0].mxu0
  %206 = vmatprep.mubr.f32.mxu0 0.0
  %207 = vmatmul.mubr.f32.gmra.mrb[0].mxu0 %v79
  %v208 = vpop.f32.mrb[0].mxu0
  %v209 = vadd.f32 %v51, %v208
  %v210 = vpop.f32.mrb[0].mxu0
  %211 = vmatprep.mubr.f32.mxu0 0.0
  %212 = vmatmul.mubr.f32.gmra.mrb[0].mxu0 %v82
  %v213 = vpop.f32.mrb[0].mxu0
  %v214 = vadd.f32 %v51, %v213
  %v215 = vpop.f32.mrb[0].mxu0
  %216 = vmatprep.mubr.f32.mxu0 0.0
  %217 = vmatmul.mubr.f32.gmra.mrb[0].mxu0 %v85
  %v218 = vpop.f32.mrb[0].mxu0
  %v219 = vadd.f32 %v51, %v218
  %v220 = vpop.f32.mrb[0].mxu0
  %221 = vmatprep.mubr.f32.mxu0 0.0
  %222 = vmatmul.mubr.f32.gmra.mrb[0].mxu0 %v88
  %v223 = vpop.f32.mrb[0].mxu0
  %v224 = vadd.f32 %v51, %v223
  %v225 = vpop.f32.mrb[0].mxu0
  %226 = vmatprep.mubr.f32.mxu0 0.0
  %227 = vmatmul.mubr.f32.gmra.mrb[0].mxu0 %v91
  %v228 = vpop.f32.mrb[0].mxu0
  %v229 = vadd.f32 %v51, %v228
  %v230 = vpop.f32.mrb[0].mxu0
  %231 = vmatprep.mubr.f32.mxu0 0.0
  %232 = vmatmul.mubr.f32.gmra.mrb[0].mxu0 %v94
  %v233 = vpop.f32.mrb[0].mxu0
  %v234 = vadd.f32 %v51, %v233
  %v235 = vpop.f32.mrb[0].mxu0
  %236 = vmatprep.mubr.f32.mxu0 0.0
  %237 = vmatmul.mubr.f32.gmra.mrb[0].mxu0 %v97
  %v238 = vpop.f32.mrb[0].mxu0
  %v239 = vadd.f32 %v51, %v238
  %v240 = vpop.f32.mrb[0].mxu0
  %241 = vmatprep.mubr.f32.mxu0 0.0
  %242 = vmatmul.mubr.f32.gmra.mrb[0].mxu0 %v100
  %v243 = vpop.f32.mrb[0].mxu0
  %v244 = vadd.f32 %v51, %v243
  %v245 = vpop.f32.mrb[0].mxu0
  %246 = vdwg.mxu0
  %v247 = vmax.f32 %v169, 0.0
  %v248 = vmax.f32 %v174, 0.0
  %v249 = vmax.f32 %v179, 0.0
  %v250 = vmax.f32 %v184, 0.0
  %v251 = vmax.f32 %v189, 0.0
  %v252 = vmax.f32 %v194, 0.0
  %v253 = vmax.f32 %v199, 0.0
  %v254 = vmax.f32 %v204, 0.0
  %v255 = vmax.f32 %v209, 0.0
  %v256 = vmax.f32 %v214, 0.0
  %v257 = vmax.f32 %v219, 0.0
  %v258 = vmax.f32 %v224, 0.0
  %v259 = vmax.f32 %v229, 0.0
  %v260 = vmax.f32 %v234, 0.0
  %v261 = vmax.f32 %v239, 0.0
  %v262 = vmax.f32 %v244, 0.0
  %vm263 = vcmask 64512
  %264 = vst.msk [vmem:[#allocation2] sm:$0xff] %vm263, 0.0
  %vm265 = vcmask 58368
  %266 = vst.msk [vmem:[#allocation2 + $0x8] sm:$0x3] %vm265, 0.0
  %267 = vst.msk [vmem:[#allocation2 + $0xa0] sm:$0xff] %vm263, 0.0
  %268 = vst.msk [vmem:[#allocation2 + $0xa8] sm:$0x3] %vm265, 0.0
  %s269 = scalar_lea.vmem [#allocation2], 144
  %270 = vst.msk [vmem:[%s269] sm:$0xff] %vm263, 0.0
  %271 = vst.msk [vmem:[%s269 + $0x8] sm:$0x3] %vm265, 0.0
  %272 = vst.msk [vmem:[%s269 + $0xa0] sm:$0xff] %vm263, 0.0
  %273 = vst.msk [vmem:[%s269 + $0xa8] sm:$0x3] %vm265, 0.0
  %s274 = scalar_lea.vmem [#allocation2], 16
  %vm275 = vcmask 57344
  %276 = vst.msk [vmem:[%s274] sm:$0x1] %vm275, 0.0
  %277 = vst.msk [vmem:[%s274 + $0x10] sm:$0x1] %vm275, 0.0
  %278 = vst.msk [vmem:[%s274 + $0x20] sm:$0x1] %vm275, 0.0
  %279 = vst.msk [vmem:[%s274 + $0x30] sm:$0x1] %vm275, 0.0
  %280 = vst.msk [vmem:[%s274 + $0x40] sm:$0x1] %vm275, 0.0
  %281 = vst.msk [vmem:[%s274 + $0x50] sm:$0x1] %vm275, 0.0
  %282 = vst.msk [vmem:[%s274 + $0x60] sm:$0x1] %vm275, 0.0
  %283 = vst.msk [vmem:[%s274 + $0x70] sm:$0x1] %vm275, 0.0
  %284 = vst.msk [vmem:[%s274 + $0xa0] sm:$0x1] %vm275, 0.0
  %285 = vst.msk [vmem:[%s274 + $0xb0] sm:$0x1] %vm275, 0.0
  %286 = vst.msk [vmem:[%s274 + $0xc0] sm:$0x1] %vm275, 0.0
  %287 = vst.msk [vmem:[%s274 + $0xd0] sm:$0x1] %vm275, 0.0
  %288 = vst.msk [vmem:[%s274 + $0xe0] sm:$0x1] %vm275, 0.0
  %289 = vst.msk [vmem:[%s274 + $0xf0] sm:$0x1] %vm275, 0.0
  %290 = vst.msk [vmem:[%s274 + $0x100] sm:$0x1] %vm275, 0.0
  %291 = vst.msk [vmem:[%s274 + $0x110] sm:$0x1] %vm275, 0.0
  %292 = vst.msk [vmem:[%s274 + $0x9] sm:$0x1] %vm275, 0.0
  %293 = vst.msk [vmem:[%s274 + $0x19] sm:$0x1] %vm275, 0.0
  %294 = vst.msk [vmem:[%s274 + $0x29] sm:$0x1] %vm275, 0.0
  %295 = vst.msk [vmem:[%s274 + $0x39] sm:$0x1] %vm275, 0.0
  %296 = vst.msk [vmem:[%s274 + $0x49] sm:$0x1] %vm275, 0.0
  %297 = vst.msk [vmem:[%s274 + $0x59] sm:$0x1] %vm275, 0.0
  %298 = vst.msk [vmem:[%s274 + $0x69] sm:$0x1] %vm275, 0.0
  %299 = vst.msk [vmem:[%s274 + $0x79] sm:$0x1] %vm275, 0.0
  %300 = vst.msk [vmem:[%s274 + $0xa9] sm:$0x1] %vm275, 0.0
  %301 = vst.msk [vmem:[%s274 + $0xb9] sm:$0x1] %vm275, 0.0
  %302 = vst.msk [vmem:[%s274 + $0xc9] sm:$0x1] %vm275, 0.0
  %303 = vst.msk [vmem:[%s274 + $0xd9] sm:$0x1] %vm275, 0.0
  %304 = vst.msk [vmem:[%s274 + $0xe9] sm:$0x1] %vm275, 0.0
  %305 = vst.msk [vmem:[%s274 + $0xf9] sm:$0x1] %vm275, 0.0
  %306 = vst.msk [vmem:[%s274 + $0x109] sm:$0x1] %vm275, 0.0
  %307 = vst.msk [vmem:[%s274 + $0x119] sm:$0x1] %vm275, 0.0
  %308 = vst.msk [vmem:[%s274 + $0x1] sm:$0xff] %vm263, %v247
  %309 = vst.msk [vmem:[%s274 + $0x11] sm:$0xff] %vm263, %v248
  %310 = vst.msk [vmem:[%s274 + $0x21] sm:$0xff] %vm263, %v249
  %311 = vst.msk [vmem:[%s274 + $0x31] sm:$0xff] %vm263, %v250
  %312 = vst.msk [vmem:[%s274 + $0x41] sm:$0xff] %vm263, %v251
  %313 = vst.msk [vmem:[%s274 + $0x51] sm:$0xff] %vm263, %v252
  %314 = vst.msk [vmem:[%s274 + $0x61] sm:$0xff] %vm263, %v253
  %315 = vst.msk [vmem:[%s274 + $0x71] sm:$0xff] %vm263, %v254
  %316 = vst.msk [vmem:[%s274 + $0xa1] sm:$0xff] %vm263, %v255
  %317 = vst.msk [vmem:[%s274 + $0xb1] sm:$0xff] %vm263, %v256
  %318 = vst.msk [vmem:[%s274 + $0xc1] sm:$0xff] %vm263, %v257
  %319 = vst.msk [vmem:[%s274 + $0xd1] sm:$0xff] %vm263, %v258
  %320 = vst.msk [vmem:[%s274 + $0xe1] sm:$0xff] %vm263, %v259
  %321 = vst.msk [vmem:[%s274 + $0xf1] sm:$0xff] %vm263, %v260
  %322 = vst.msk [vmem:[%s274 + $0x101] sm:$0xff] %vm263, %v261
  %323 = vst.msk [vmem:[%s274 + $0x111] sm:$0xff] %vm263, %v262
  %v324 = vld [vmem:[#allocation2] sm:$0xff]
  %v325 = vld [vmem:[#allocation2 + $0x10] sm:$0xff]
  %v326 = vld [vmem:[#allocation2 + $0x20] sm:$0xff]
  %v327 = vld [vmem:[#allocation2 + $0x30] sm:$0xff]
  %v328 = vld [vmem:[#allocation2 + $0x40] sm:$0xff]
  %v329 = vld [vmem:[#allocation2 + $0x50] sm:$0xff]
  %v330 = vld [vmem:[#allocation2 + $0x60] sm:$0xff]
  %v331 = vld [vmem:[#allocation2 + $0x70] sm:$0xff]
  %v332 = vld [vmem:[#allocation2 + $0xa0] sm:$0xff]
  %v333 = vld [vmem:[#allocation2 + $0xb0] sm:$0xff]
  %v334 = vld [vmem:[#allocation2 + $0xc0] sm:$0xff]
  %v335 = vld [vmem:[#allocation2 + $0xd0] sm:$0xff]
  %v336 = vld [vmem:[#allocation2 + $0xe0] sm:$0xff]
  %v337 = vld [vmem:[#allocation2 + $0xf0] sm:$0xff]
  %v338 = vld [vmem:[#allocation2 + $0x100] sm:$0xff]
  %v339 = vld [vmem:[#allocation2 + $0x110] sm:$0xff]
  %v340 = vld [vmem:[#allocation2 + $0x1] sm:$0xff]
  %v341 = vld [vmem:[#allocation2 + $0x11] sm:$0xff]
  %v342 = vld [vmem:[#allocation2 + $0x21] sm:$0xff]
  %v343 = vld [vmem:[#allocation2 + $0x31] sm:$0xff]
  %v344 = vld [vmem:[#allocation2 + $0x41] sm:$0xff]
  %v345 = vld [vmem:[#allocation2 + $0x51] sm:$0xff]
  %v346 = vld [vmem:[#allocation2 + $0x61] sm:$0xff]
  %v347 = vld [vmem:[#allocation2 + $0x71] sm:$0xff]
  %v348 = vld [vmem:[#allocation2 + $0xa1] sm:$0xff]
  %v349 = vld [vmem:[#allocation2 + $0xb1] sm:$0xff]
  %v350 = vld [vmem:[#allocation2 + $0xc1] sm:$0xff]
  %v351 = vld [vmem:[#allocation2 + $0xd1] sm:$0xff]
  %v352 = vld [vmem:[#allocation2 + $0xe1] sm:$0xff]
  %v353 = vld [vmem:[#allocation2 + $0xf1] sm:$0xff]
  %v354 = vld [vmem:[#allocation2 + $0x101] sm:$0xff]
  %v355 = vld [vmem:[#allocation2 + $0x111] sm:$0xff]
  %v356 = vld [vmem:[#allocation2 + $0x2] sm:$0xff]
  %v357 = vld [vmem:[#allocation2 + $0x12] sm:$0xff]
  %v358 = vld [vmem:[#allocation2 + $0x22] sm:$0xff]
  %v359 = vld [vmem:[#allocation2 + $0x32] sm:$0xff]
  %v360 = vld [vmem:[#allocation2 + $0x42] sm:$0xff]
  %v361 = vld [vmem:[#allocation2 + $0x52] sm:$0xff]
  %v362 = vld [vmem:[#allocation2 + $0x62] sm:$0xff]
  %v363 = vld [vmem:[#allocation2 + $0x72] sm:$0xff]
  %v364 = vld [vmem:[#allocation2 + $0xa2] sm:$0xff]
  %v365 = vld [vmem:[#allocation2 + $0xb2] sm:$0xff]
  %v366 = vld [vmem:[#allocation2 + $0xc2] sm:$0xff]
  %v367 = vld [vmem:[#allocation2 + $0xd2] sm:$0xff]
  %v368 = vld [vmem:[#allocation2 + $0xe2] sm:$0xff]
  %v369 = vld [vmem:[#allocation2 + $0xf2] sm:$0xff]
  %v370 = vld [vmem:[#allocation2 + $0x102] sm:$0xff]
  %v371 = vld [vmem:[#allocation2 + $0x112] sm:$0xff]
  %v372 = vld [vmem:[%s274] sm:$0xff]
  %v373 = vld [vmem:[%s274 + $0x10] sm:$0xff]
  %v374 = vld [vmem:[%s274 + $0x20] sm:$0xff]
  %v375 = vld [vmem:[%s274 + $0x30] sm:$0xff]
  %v376 = vld [vmem:[%s274 + $0x40] sm:$0xff]
  %v377 = vld [vmem:[%s274 + $0x50] sm:$0xff]
  %v378 = vld [vmem:[%s274 + $0x60] sm:$0xff]
  %v379 = vld [vmem:[%s274 + $0x70] sm:$0xff]
  %v380 = vld [vmem:[%s274 + $0xa0] sm:$0xff]
  %v381 = vld [vmem:[%s274 + $0xb0] sm:$0xff]
  %v382 = vld [vmem:[%s274 + $0xc0] sm:$0xff]
  %v383 = vld [vmem:[%s274 + $0xd0] sm:$0xff]
  %v384 = vld [vmem:[%s274 + $0xe0] sm:$0xff]
  %v385 = vld [vmem:[%s274 + $0xf0] sm:$0xff]
  %v386 = vld [vmem:[%s274 + $0x100] sm:$0xff]
  %v387 = vld [vmem:[%s274 + $0x110] sm:$0xff]
  %v388 = vld [vmem:[%s274 + $0x1] sm:$0xff]
  %v389 = vld [vmem:[%s274 + $0x11] sm:$0xff]
  %v390 = vld [vmem:[%s274 + $0x21] sm:$0xff]
  %v391 = vld [vmem:[%s274 + $0x31] sm:$0xff]
  %v392 = vld [vmem:[%s274 + $0x41] sm:$0xff]
  %v393 = vld [vmem:[%s274 + $0x51] sm:$0xff]
  %v394 = vld [vmem:[%s274 + $0x61] sm:$0xff]
  %v395 = vld [vmem:[%s274 + $0x71] sm:$0xff]
  %v396 = vld [vmem:[%s274 + $0xa1] sm:$0xff]
  %v397 = vld [vmem:[%s274 + $0xb1] sm:$0xff]
  %v398 = vld [vmem:[%s274 + $0xc1] sm:$0xff]
  %v399 = vld [vmem:[%s274 + $0xd1] sm:$0xff]
  %v400 = vld [vmem:[%s274 + $0xe1] sm:$0xff]
  %v401 = vld [vmem:[%s274 + $0xf1] sm:$0xff]
  %v402 = vld [vmem:[%s274 + $0x101] sm:$0xff]
  %v403 = vld [vmem:[%s274 + $0x111] sm:$0xff]
  %v404 = vld [vmem:[%s274 + $0x2] sm:$0xff]
  %v405 = vld [vmem:[%s274 + $0x12] sm:$0xff]
  %v406 = vld [vmem:[%s274 + $0x22] sm:$0xff]
  %v407 = vld [vmem:[%s274 + $0x32] sm:$0xff]
  %v408 = vld [vmem:[%s274 + $0x42] sm:$0xff]
  %v409 = vld [vmem:[%s274 + $0x52] sm:$0xff]
  %v410 = vld [vmem:[%s274 + $0x62] sm:$0xff]
  %v411 = vld [vmem:[%s274 + $0x72] sm:$0xff]
  %v412 = vld [vmem:[%s274 + $0xa2] sm:$0xff]
  %v413 = vld [vmem:[%s274 + $0xb2] sm:$0xff]
  %v414 = vld [vmem:[%s274 + $0xc2] sm:$0xff]
  %v415 = vld [vmem:[%s274 + $0xd2] sm:$0xff]
  %v416 = vld [vmem:[%s274 + $0xe2] sm:$0xff]
  %v417 = vld [vmem:[%s274 + $0xf2] sm:$0xff]
  %v418 = vld [vmem:[%s274 + $0x102] sm:$0xff]
  %v419 = vld [vmem:[%s274 + $0x112] sm:$0xff]
  %s420 = scalar_lea.vmem [#allocation2], 32
  %v421 = vld [vmem:[%s420] sm:$0xff]
  %v422 = vld [vmem:[%s420 + $0x10] sm:$0xff]
  %v423 = vld [vmem:[%s420 + $0x20] sm:$0xff]
  %v424 = vld [vmem:[%s420 + $0x30] sm:$0xff]
  %v425 = vld [vmem:[%s420 + $0x40] sm:$0xff]
  %v426 = vld [vmem:[%s420 + $0x50] sm:$0xff]
  %v427 = vld [vmem:[%s420 + $0x60] sm:$0xff]
  %v428 = vld [vmem:[%s420 + $0x70] sm:$0xff]
  %v429 = vld [vmem:[%s420 + $0xa0] sm:$0xff]
  %v430 = vld [vmem:[%s420 + $0xb0] sm:$0xff]
  %v431 = vld [vmem:[%s420 + $0xc0] sm:$0xff]
  %v432 = vld [vmem:[%s420 + $0xd0] sm:$0xff]
  %v433 = vld [vmem:[%s420 + $0xe0] sm:$0xff]
  %v434 = vld [vmem:[%s420 + $0xf0] sm:$0xff]
  %v435 = vld [vmem:[%s420 + $0x100] sm:$0xff]
  %v436 = vld [vmem:[%s420 + $0x110] sm:$0xff]
  %v437 = vld [vmem:[%s420 + $0x1] sm:$0xff]
  %v438 = vld [vmem:[%s420 + $0x11] sm:$0xff]
  %v439 = vld [vmem:[%s420 + $0x21] sm:$0xff]
  %v440 = vld [vmem:[%s420 + $0x31] sm:$0xff]
  %v441 = vld [vmem:[%s420 + $0x41] sm:$0xff]
  %v442 = vld [vmem:[%s420 + $0x51] sm:$0xff]
  %v443 = vld [vmem:[%s420 + $0x61] sm:$0xff]
  %v444 = vld [vmem:[%s420 + $0x71] sm:$0xff]
  %v445 = vld [vmem:[%s420 + $0xa1] sm:$0xff]
  %v446 = vld [vmem:[%s420 + $0xb1] sm:$0xff]
  %v447 = vld [vmem:[%s420 + $0xc1] sm:$0xff]
  %v448 = vld [vmem:[%s420 + $0xd1] sm:$0xff]
  %v449 = vld [vmem:[%s420 + $0xe1] sm:$0xff]
  %v450 = vld [vmem:[%s420 + $0xf1] sm:$0xff]
  %v451 = vld [vmem:[%s420 + $0x101] sm:$0xff]
  %v452 = vld [vmem:[%s420 + $0x111] sm:$0xff]
  %v453 = vld [vmem:[%s420 + $0x2] sm:$0xff]
  %v454 = vld [vmem:[%s420 + $0x12] sm:$0xff]
  %v455 = vld [vmem:[%s420 + $0x22] sm:$0xff]
  %v456 = vld [vmem:[%s420 + $0x32] sm:$0xff]
  %v457 = vld [vmem:[%s420 + $0x42] sm:$0xff]
  %v458 = vld [vmem:[%s420 + $0x52] sm:$0xff]
  %v459 = vld [vmem:[%s420 + $0x62] sm:$0xff]
  %v460 = vld [vmem:[%s420 + $0x72] sm:$0xff]
  %v461 = vld [vmem:[%s420 + $0xa2] sm:$0xff]
  %v462 = vld [vmem:[%s420 + $0xb2] sm:$0xff]
  %v463 = vld [vmem:[%s420 + $0xc2] sm:$0xff]
  %v464 = vld [vmem:[%s420 + $0xd2] sm:$0xff]
  %v465 = vld [vmem:[%s420 + $0xe2] sm:$0xff]
  %v466 = vld [vmem:[%s420 + $0xf2] sm:$0xff]
  %v467 = vld [vmem:[%s420 + $0x102] sm:$0xff]
  %v468 = vld [vmem:[%s420 + $0x112] sm:$0xff]
  %485 = vrot.lane.b32.xlu0 %v340, 8
  %v486 = vpop.permute.xlu0 %485
  %487 = vrot.lane.b32.xlu0 %v341, 8
  %v488 = vpop.permute.xlu0 %487
  %489 = vrot.lane.b32.xlu0 %v342, 8
  %v490 = vpop.permute.xlu0 %489
  %491 = vrot.lane.b32.xlu0 %v343, 8
  %v492 = vpop.permute.xlu0 %491
  %493 = vrot.lane.b32.xlu0 %v344, 8
  %v494 = vpop.permute.xlu0 %493
  %495 = vrot.lane.b32.xlu0 %v345, 8
  %v496 = vpop.permute.xlu0 %495
  %497 = vrot.lane.b32.xlu0 %v346, 8
  %v498 = vpop.permute.xlu0 %497
  %499 = vrot.lane.b32.xlu0 %v347, 8
  %v500 = vpop.permute.xlu0 %499
  %501 = vrot.lane.b32.xlu0 %v348, 8
  %v502 = vpop.permute.xlu0 %501
  %503 = vrot.lane.b32.xlu0 %v349, 8
  %v504 = vpop.permute.xlu0 %503
  %505 = vrot.lane.b32.xlu0 %v350, 8
  %v506 = vpop.permute.xlu0 %505
  %507 = vrot.lane.b32.xlu0 %v351, 8
  %v508 = vpop.permute.xlu0 %507
  %509 = vrot.lane.b32.xlu0 %v352, 8
  %v510 = vpop.permute.xlu0 %509
  %511 = vrot.lane.b32.xlu0 %v353, 8
  %v512 = vpop.permute.xlu0 %511
  %513 = vrot.lane.b32.xlu0 %v354, 8
  %v514 = vpop.permute.xlu0 %513
  %515 = vrot.lane.b32.xlu0 %v355, 8
  %v516 = vpop.permute.xlu0 %515
  %549 = vrot.lane.b32.xlu0 %v356, 16
  %v550 = vpop.permute.xlu0 %549
  %551 = vrot.lane.b32.xlu0 %v357, 16
  %v552 = vpop.permute.xlu0 %551
  %553 = vrot.lane.b32.xlu0 %v358, 16
  %v554 = vpop.permute.xlu0 %553
  %555 = vrot.lane.b32.xlu0 %v359, 16
  %v556 = vpop.permute.xlu0 %555
  %557 = vrot.lane.b32.xlu0 %v360, 16
  %v558 = vpop.permute.xlu0 %557
  %559 = vrot.lane.b32.xlu0 %v361, 16
  %v560 = vpop.permute.xlu0 %559
  %561 = vrot.lane.b32.xlu0 %v362, 16
  %v562 = vpop.permute.xlu0 %561
  %563 = vrot.lane.b32.xlu0 %v363, 16
  %v564 = vpop.permute.xlu0 %563
  %565 = vrot.lane.b32.xlu0 %v364, 16
  %v566 = vpop.permute.xlu0 %565
  %567 = vrot.lane.b32.xlu0 %v365, 16
  %v568 = vpop.permute.xlu0 %567
  %569 = vrot.lane.b32.xlu0 %v366, 16
  %v570 = vpop.permute.xlu0 %569
  %571 = vrot.lane.b32.xlu0 %v367, 16
  %v572 = vpop.permute.xlu0 %571
  %573 = vrot.lane.b32.xlu0 %v368, 16
  %v574 = vpop.permute.xlu0 %573
  %575 = vrot.lane.b32.xlu0 %v369, 16
  %v576 = vpop.permute.xlu0 %575
  %577 = vrot.lane.b32.xlu0 %v370, 16
  %v578 = vpop.permute.xlu0 %577
  %579 = vrot.lane.b32.xlu0 %v371, 16
  %v580 = vpop.permute.xlu0 %579
  %613 = vrot.lane.b32.xlu0 %v372, 24
  %v614 = vpop.permute.xlu0 %613
  %615 = vrot.lane.b32.xlu0 %v373, 24
  %v616 = vpop.permute.xlu0 %615
  %617 = vrot.lane.b32.xlu0 %v374, 24
  %v618 = vpop.permute.xlu0 %617
  %619 = vrot.lane.b32.xlu0 %v375, 24
  %v620 = vpop.permute.xlu0 %619
  %621 = vrot.lane.b32.xlu0 %v376, 24
  %v622 = vpop.permute.xlu0 %621
  %623 = vrot.lane.b32.xlu0 %v377, 24
  %v624 = vpop.permute.xlu0 %623
  %625 = vrot.lane.b32.xlu0 %v378, 24
  %v626 = vpop.permute.xlu0 %625
  %627 = vrot.lane.b32.xlu0 %v379, 24
  %v628 = vpop.permute.xlu0 %627
  %629 = vrot.lane.b32.xlu0 %v380, 24
  %v630 = vpop.permute.xlu0 %629
  %631 = vrot.lane.b32.xlu0 %v381, 24
  %v632 = vpop.permute.xlu0 %631
  %633 = vrot.lane.b32.xlu0 %v382, 24
  %v634 = vpop.permute.xlu0 %633
  %635 = vrot.lane.b32.xlu0 %v383, 24
  %v636 = vpop.permute.xlu0 %635
  %637 = vrot.lane.b32.xlu0 %v384, 24
  %v638 = vpop.permute.xlu0 %637
  %639 = vrot.lane.b32.xlu0 %v385, 24
  %v640 = vpop.permute.xlu0 %639
  %641 = vrot.lane.b32.xlu0 %v386, 24
  %v642 = vpop.permute.xlu0 %641
  %643 = vrot.lane.b32.xlu0 %v387, 24
  %v644 = vpop.permute.xlu0 %643
  %677 = vrot.lane.b32.xlu0 %v388, 32
  %v678 = vpop.permute.xlu0 %677
  %679 = vrot.lane.b32.xlu0 %v389, 32
  %v680 = vpop.permute.xlu0 %679
  %681 = vrot.lane.b32.xlu0 %v390, 32
  %v682 = vpop.permute.xlu0 %681
  %683 = vrot.lane.b32.xlu0 %v391, 32
  %v684 = vpop.permute.xlu0 %683
  %685 = vrot.lane.b32.xlu0 %v392, 32
  %v686 = vpop.permute.xlu0 %685
  %687 = vrot.lane.b32.xlu0 %v393, 32
  %v688 = vpop.permute.xlu0 %687
  %689 = vrot.lane.b32.xlu0 %v394, 32
  %v690 = vpop.permute.xlu0 %689
  %691 = vrot.lane.b32.xlu0 %v395, 32
  %v692 = vpop.permute.xlu0 %691
  %693 = vrot.lane.b32.xlu0 %v396, 32
  %v694 = vpop.permute.xlu0 %693
  %695 = vrot.lane.b32.xlu0 %v397, 32
  %v696 = vpop.permute.xlu0 %695
  %697 = vrot.lane.b32.xlu0 %v398, 32
  %v698 = vpop.permute.xlu0 %697
  %699 = vrot.lane.b32.xlu0 %v399, 32
  %v700 = vpop.permute.xlu0 %699
  %701 = vrot.lane.b32.xlu0 %v400, 32
  %v702 = vpop.permute.xlu0 %701
  %703 = vrot.lane.b32.xlu0 %v401, 32
  %v704 = vpop.permute.xlu0 %703
  %705 = vrot.lane.b32.xlu0 %v402, 32
  %v706 = vpop.permute.xlu0 %705
  %707 = vrot.lane.b32.xlu0 %v403, 32
  %v708 = vpop.permute.xlu0 %707
  %741 = vrot.lane.b32.xlu0 %v404, 40
  %v742 = vpop.permute.xlu0 %741
  %743 = vrot.lane.b32.xlu0 %v405, 40
  %v744 = vpop.permute.xlu0 %743
  %745 = vrot.lane.b32.xlu0 %v406, 40
  %v746 = vpop.permute.xlu0 %745
  %747 = vrot.lane.b32.xlu0 %v407, 40
  %v748 = vpop.permute.xlu0 %747
  %749 = vrot.lane.b32.xlu0 %v408, 40
  %v750 = vpop.permute.xlu0 %749
  %751 = vrot.lane.b32.xlu0 %v409, 40
  %v752 = vpop.permute.xlu0 %751
  %753 = vrot.lane.b32.xlu0 %v410, 40
  %v754 = vpop.permute.xlu0 %753
  %755 = vrot.lane.b32.xlu0 %v411, 40
  %v756 = vpop.permute.xlu0 %755
  %757 = vrot.lane.b32.xlu0 %v412, 40
  %v758 = vpop.permute.xlu0 %757
  %759 = vrot.lane.b32.xlu0 %v413, 40
  %v760 = vpop.permute.xlu0 %759
  %761 = vrot.lane.b32.xlu0 %v414, 40
  %v762 = vpop.permute.xlu0 %761
  %763 = vrot.lane.b32.xlu0 %v415, 40
  %v764 = vpop.permute.xlu0 %763
  %765 = vrot.lane.b32.xlu0 %v416, 40
  %v766 = vpop.permute.xlu0 %765
  %767 = vrot.lane.b32.xlu0 %v417, 40
  %v768 = vpop.permute.xlu0 %767
  %769 = vrot.lane.b32.xlu0 %v418, 40
  %v770 = vpop.permute.xlu0 %769
  %771 = vrot.lane.b32.xlu0 %v419, 40
  %v772 = vpop.permute.xlu0 %771
  %805 = vrot.lane.b32.xlu0 %v421, 48
  %v806 = vpop.permute.xlu0 %805
  %807 = vrot.lane.b32.xlu0 %v422, 48
  %v808 = vpop.permute.xlu0 %807
  %809 = vrot.lane.b32.xlu0 %v423, 48
  %v810 = vpop.permute.xlu0 %809
  %811 = vrot.lane.b32.xlu0 %v424, 48
  %v812 = vpop.permute.xlu0 %811
  %813 = vrot.lane.b32.xlu0 %v425, 48
  %v814 = vpop.permute.xlu0 %813
  %815 = vrot.lane.b32.xlu0 %v426, 48
  %v816 = vpop.permute.xlu0 %815
  %817 = vrot.lane.b32.xlu0 %v427, 48
  %v818 = vpop.permute.xlu0 %817
  %819 = vrot.lane.b32.xlu0 %v428, 48
  %v820 = vpop.permute.xlu0 %819
  %821 = vrot.lane.b32.xlu0 %v429, 48
  %v822 = vpop.permute.xlu0 %821
  %823 = vrot.lane.b32.xlu0 %v430, 48
  %v824 = vpop.permute.xlu0 %823
  %825 = vrot.lane.b32.xlu0 %v431, 48
  %v826 = vpop.permute.xlu0 %825
  %827 = vrot.lane.b32.xlu0 %v432, 48
  %v828 = vpop.permute.xlu0 %827
  %829 = vrot.lane.b32.xlu0 %v433, 48
  %v830 = vpop.permute.xlu0 %829
  %831 = vrot.lane.b32.xlu0 %v434, 48
  %v832 = vpop.permute.xlu0 %831
  %833 = vrot.lane.b32.xlu0 %v435, 48
  %v834 = vpop.permute.xlu0 %833
  %835 = vrot.lane.b32.xlu0 %v436, 48
  %v836 = vpop.permute.xlu0 %835
  %869 = vrot.lane.b32.xlu0 %v437, 56
  %v870 = vpop.permute.xlu0 %869
  %871 = vrot.lane.b32.xlu0 %v438, 56
  %v872 = vpop.permute.xlu0 %871
  %873 = vrot.lane.b32.xlu0 %v439, 56
  %v874 = vpop.permute.xlu0 %873
  %875 = vrot.lane.b32.xlu0 %v440, 56
  %v876 = vpop.permute.xlu0 %875
  %877 = vrot.lane.b32.xlu0 %v441, 56
  %v878 = vpop.permute.xlu0 %877
  %879 = vrot.lane.b32.xlu0 %v442, 56
  %v880 = vpop.permute.xlu0 %879
  %881 = vrot.lane.b32.xlu0 %v443, 56
  %v882 = vpop.permute.xlu0 %881
  %883 = vrot.lane.b32.xlu0 %v444, 56
  %v884 = vpop.permute.xlu0 %883
  %885 = vrot.lane.b32.xlu0 %v445, 56
  %v886 = vpop.permute.xlu0 %885
  %887 = vrot.lane.b32.xlu0 %v446, 56
  %v888 = vpop.permute.xlu0 %887
  %889 = vrot.lane.b32.xlu0 %v447, 56
  %v890 = vpop.permute.xlu0 %889
  %891 = vrot.lane.b32.xlu0 %v448, 56
  %v892 = vpop.permute.xlu0 %891
  %893 = vrot.lane.b32.xlu0 %v449, 56
  %v894 = vpop.permute.xlu0 %893
  %895 = vrot.lane.b32.xlu0 %v450, 56
  %v896 = vpop.permute.xlu0 %895
  %897 = vrot.lane.b32.xlu0 %v451, 56
  %v898 = vpop.permute.xlu0 %897
  %899 = vrot.lane.b32.xlu0 %v452, 56
  %v900 = vpop.permute.xlu0 %899
  %933 = vrot.lane.b32.xlu0 %v453, 64
  %v934 = vpop.permute.xlu0 %933
  %935 = vrot.lane.b32.xlu0 %v454, 64
  %v936 = vpop.permute.xlu0 %935
  %937 = vrot.lane.b32.xlu0 %v455, 64
  %v938 = vpop.permute.xlu0 %937
  %939 = vrot.lane.b32.xlu0 %v456, 64
  %v940 = vpop.permute.xlu0 %939
  %941 = vrot.lane.b32.xlu0 %v457, 64
  %v942 = vpop.permute.xlu0 %941
  %943 = vrot.lane.b32.xlu0 %v458, 64
  %v944 = vpop.permute.xlu0 %943
  %945 = vrot.lane.b32.xlu0 %v459, 64
  %v946 = vpop.permute.xlu0 %945
  %947 = vrot.lane.b32.xlu0 %v460, 64
  %v948 = vpop.permute.xlu0 %947
  %949 = vrot.lane.b32.xlu0 %v461, 64
  %v950 = vpop.permute.xlu0 %949
  %951 = vrot.lane.b32.xlu0 %v462, 64
  %v952 = vpop.permute.xlu0 %951
  %953 = vrot.lane.b32.xlu0 %v463, 64
  %v954 = vpop.permute.xlu0 %953
  %955 = vrot.lane.b32.xlu0 %v464, 64
  %v956 = vpop.permute.xlu0 %955
  %957 = vrot.lane.b32.xlu0 %v465, 64
  %v958 = vpop.permute.xlu0 %957
  %959 = vrot.lane.b32.xlu0 %v466, 64
  %v960 = vpop.permute.xlu0 %959
  %961 = vrot.lane.b32.xlu0 %v467, 64
  %v962 = vpop.permute.xlu0 %961
  %963 = vrot.lane.b32.xlu0 %v468, 64
  %v964 = vpop.permute.xlu0 %963
  %v981 = vsel %vm263, %v324, %v486
  %v982 = vsel %vm263, %v325, %v488
  %v983 = vsel %vm263, %v326, %v490
  %v984 = vsel %vm263, %v327, %v492
  %v985 = vsel %vm263, %v328, %v494
  %v986 = vsel %vm263, %v329, %v496
  %v987 = vsel %vm263, %v330, %v498
  %v988 = vsel %vm263, %v331, %v500
  %v989 = vsel %vm263, %v332, %v502
  %v990 = vsel %vm263, %v333, %v504
  %v991 = vsel %vm263, %v334, %v506
  %v992 = vsel %vm263, %v335, %v508
  %v993 = vsel %vm263, %v336, %v510
  %v994 = vsel %vm263, %v337, %v512
  %v995 = vsel %vm263, %v338, %v514
  %v996 = vsel %vm263, %v339, %v516
  %vm997 = vcmask 130048
  %v998 = vsel %vm997, %v981, %v550
  %v999 = vsel %vm997, %v982, %v552
  %v1000 = vsel %vm997, %v983, %v554
  %v1001 = vsel %vm997, %v984, %v556
  %v1002 = vsel %vm997, %v985, %v558
  %v1003 = vsel %vm997, %v986, %v560
  %v1004 = vsel %vm997, %v987, %v562
  %v1005 = vsel %vm997, %v988, %v564
  %v1006 = vsel %vm997, %v989, %v566
  %v1007 = vsel %vm997, %v990, %v568
  %v1008 = vsel %vm997, %v991, %v570
  %v1009 = vsel %vm997, %v992, %v572
  %v1010 = vsel %vm997, %v993, %v574
  %v1011 = vsel %vm997, %v994, %v576
  %v1012 = vsel %vm997, %v995, %v578
  %v1013 = vsel %vm997, %v996, %v580
  %vm1014 = vcmask 195584
  %v1015 = vsel %vm1014, %v998, %v614
  %v1016 = vsel %vm1014, %v999, %v616
  %v1017 = vsel %vm1014, %v1000, %v618
  %v1018 = vsel %vm1014, %v1001, %v620
  %v1019 = vsel %vm1014, %v1002, %v622
  %v1020 = vsel %vm1014, %v1003, %v624
  %v1021 = vsel %vm1014, %v1004, %v626
  %v1022 = vsel %vm1014, %v1005, %v628
  %v1023 = vsel %vm1014, %v1006, %v630
  %v1024 = vsel %vm1014, %v1007, %v632
  %v1025 = vsel %vm1014, %v1008, %v634
  %v1026 = vsel %vm1014, %v1009, %v636
  %v1027 = vsel %vm1014, %v1010, %v638
  %v1028 = vsel %vm1014, %v1011, %v640
  %v1029 = vsel %vm1014, %v1012, %v642
  %v1030 = vsel %vm1014, %v1013, %v644
  %v1031 = vsel %vm53, %v1015, %v678
  %v1032 = vsel %vm53, %v1016, %v680
  %v1033 = vsel %vm53, %v1017, %v682
  %v1034 = vsel %vm53, %v1018, %v684
  %v1035 = vsel %vm53, %v1019, %v686
  %v1036 = vsel %vm53, %v1020, %v688
  %v1037 = vsel %vm53, %v1021, %v690
  %v1038 = vsel %vm53, %v1022, %v692
  %v1039 = vsel %vm53, %v1023, %v694
  %v1040 = vsel %vm53, %v1024, %v696
  %v1041 = vsel %vm53, %v1025, %v698
  %v1042 = vsel %vm53, %v1026, %v700
  %v1043 = vsel %vm53, %v1027, %v702
  %v1044 = vsel %vm53, %v1028, %v704
  %v1045 = vsel %vm53, %v1029, %v706
  %v1046 = vsel %vm53, %v1030, %v708
  %vm1047 = vcmask 326656
  %v1048 = vsel %vm1047, %v1031, %v742
  %v1049 = vsel %vm1047, %v1032, %v744
  %v1050 = vsel %vm1047, %v1033, %v746
  %v1051 = vsel %vm1047, %v1034, %v748
  %v1052 = vsel %vm1047, %v1035, %v750
  %v1053 = vsel %vm1047, %v1036, %v752
  %v1054 = vsel %vm1047, %v1037, %v754
  %v1055 = vsel %vm1047, %v1038, %v756
  %v1056 = vsel %vm1047, %v1039, %v758
  %v1057 = vsel %vm1047, %v1040, %v760
  %v1058 = vsel %vm1047, %v1041, %v762
  %v1059 = vsel %vm1047, %v1042, %v764
  %v1060 = vsel %vm1047, %v1043, %v766
  %v1061 = vsel %vm1047, %v1044, %v768
  %v1062 = vsel %vm1047, %v1045, %v770
  %v1063 = vsel %vm1047, %v1046, %v772
  %vm1064 = vcmask 392192
  %v1065 = vsel %vm1064, %v1048, %v806
  %v1066 = vsel %vm1064, %v1049, %v808
  %v1067 = vsel %vm1064, %v1050, %v810
  %v1068 = vsel %vm1064, %v1051, %v812
  %v1069 = vsel %vm1064, %v1052, %v814
  %v1070 = vsel %vm1064, %v1053, %v816
  %v1071 = vsel %vm1064, %v1054, %v818
  %v1072 = vsel %vm1064, %v1055, %v820
  %v1073 = vsel %vm1064, %v1056, %v822
  %v1074 = vsel %vm1064, %v1057, %v824
  %v1075 = vsel %vm1064, %v1058, %v826
  %v1076 = vsel %vm1064, %v1059, %v828
  %v1077 = vsel %vm1064, %v1060, %v830
  %v1078 = vsel %vm1064, %v1061, %v832
  %v1079 = vsel %vm1064, %v1062, %v834
  %v1080 = vsel %vm1064, %v1063, %v836
  %vm1081 = vcmask 457728
  %v1082 = vsel %vm1081, %v1065, %v870
  %v1083 = vsel %vm1081, %v1066, %v872
  %v1084 = vsel %vm1081, %v1067, %v874
  %v1085 = vsel %vm1081, %v1068, %v876
  %v1086 = vsel %vm1081, %v1069, %v878
  %v1087 = vsel %vm1081, %v1070, %v880
  %v1088 = vsel %vm1081, %v1071, %v882
  %v1089 = vsel %vm1081, %v1072, %v884
  %v1090 = vsel %vm1081, %v1073, %v886
  %v1091 = vsel %vm1081, %v1074, %v888
  %v1092 = vsel %vm1081, %v1075, %v890
  %v1093 = vsel %vm1081, %v1076, %v892
  %v1094 = vsel %vm1081, %v1077, %v894
  %v1095 = vsel %vm1081, %v1078, %v896
  %v1096 = vsel %vm1081, %v1079, %v898
  %v1097 = vsel %vm1081, %v1080, %v900
  %vm1098 = vcmask 523264
  %v1099 = vsel %vm1098, %v1082, %v934
  %v1100 = vsel %vm1098, %v1083, %v936
  %v1101 = vsel %vm1098, %v1084, %v938
  %v1102 = vsel %vm1098, %v1085, %v940
  %v1103 = vsel %vm1098, %v1086, %v942
  %v1104 = vsel %vm1098, %v1087, %v944
  %v1105 = vsel %vm1098, %v1088, %v946
  %v1106 = vsel %vm1098, %v1089, %v948
  %v1107 = vsel %vm1098, %v1090, %v950
  %v1108 = vsel %vm1098, %v1091, %v952
  %v1109 = vsel %vm1098, %v1092, %v954
  %v1110 = vsel %vm1098, %v1093, %v956
  %v1111 = vsel %vm1098, %v1094, %v958
  %v1112 = vsel %vm1098, %v1095, %v960
  %v1113 = vsel %vm1098, %v1096, %v962
  %v1114 = vsel %vm1098, %v1097, %v964
  %v1115 = vld [vmem:[%s3] sm:$0xff]
  %v1116 = vld [vmem:[%s3 + $0x8] sm:$0xff]
  %v1117 = vld [vmem:[%s3 + $0x10] sm:$0xff]
  %v1118 = vld [vmem:[%s3 + $0x18] sm:$0xff]
  %v1119 = vld [vmem:[%s3 + $0x20] sm:$0xff]
  %v1120 = vld [vmem:[%s3 + $0x28] sm:$0xff]
  %v1121 = vld [vmem:[%s3 + $0x30] sm:$0xff]
  %v1122 = vld [vmem:[%s3 + $0x38] sm:$0xff]
  %v1123 = vld [vmem:[%s3 + $0x40] sm:$0xff]
  %v1124 = vld [vmem:[%s4] sm:$0x1]
  %v1126 = vlaneseq
  %v1127 = vshrl.u32 %v1126, 7
  %v1128 = vsub.s32 0, %v1127
  %v1129 = vrot.slane %v1124, %v1128
  %vm1131 = vcmask 588800
  %v1133 = vsel %vm1131, %v1099, 0
  %v1136 = vsel %vm1131, %v1100, 0
  %v1139 = vsel %vm1131, %v1101, 0
  %v1142 = vsel %vm1131, %v1102, 0
  %v1145 = vsel %vm1131, %v1103, 0
  %v1148 = vsel %vm1131, %v1104, 0
  %v1151 = vsel %vm1131, %v1105, 0
  %v1154 = vsel %vm1131, %v1106, 0
  %v1157 = vsel %vm1131, %v1107, 0
  %v1160 = vsel %vm1131, %v1108, 0
  %v1163 = vsel %vm1131, %v1109, 0
  %v1166 = vsel %vm1131, %v1110, 0
  %v1169 = vsel %vm1131, %v1111, 0
  %v1172 = vsel %vm1131, %v1112, 0
  %v1175 = vsel %vm1131, %v1113, 0
  %v1178 = vsel %vm1131, %v1114, 0
  %1180 = vmatprep.subr.mxu0 0.0
  %1181 = vmatpush1.msra.mxu0 %v1115
  %1182 = vmatprep.subr.mxu0 0.0
  %1183 = vmatpush1.msra.mxu0 %v1116
  %1184 = vmatprep.subr.mxu0 0.0
  %1185 = vmatpush1.msra.mxu0 %v1117
  %1186 = vmatprep.subr.mxu0 0.0
  %1187 = vmatpush1.msra.mxu0 %v1118
  %1188 = vmatprep.subr.mxu0 0.0
  %1189 = vmatpush1.msra.mxu0 %v1119
  %1190 = vmatprep.subr.mxu0 0.0
  %1191 = vmatpush1.msra.mxu0 %v1120
  %1192 = vmatprep.subr.mxu0 0.0
  %1193 = vmatpush1.msra.mxu0 %v1121
  %1194 = vmatprep.subr.mxu0 0.0
  %1195 = vmatpush1.msra.mxu0 %v1122
  %1196 = vmatprep.subr.mxu0 0.0
  %1197 = vmatpush1.msra.mxu0 %v1123
  %1198 = vmatprep.subr.mxu0 0.0
  %1199 = vmatpush1.msra.mxu0 0.0
  %1200 = vmatprep.subr.mxu0 0.0
  %1201 = vmatpush1.msra.mxu0 0.0
  %1202 = vmatprep.subr.mxu0 0.0
  %1203 = vmatpush1.msra.mxu0 0.0
  %1204 = vmatprep.subr.mxu0 0.0
  %1205 = vmatpush1.msra.mxu0 0.0
  %1206 = vmatprep.subr.mxu0 0.0
  %1207 = vmatpush1.msra.mxu0 0.0
  %1208 = vmatprep.subr.mxu0 0.0
  %1209 = vmatpush1.msra.mxu0 0.0
  %1210 = vmatprep.subr.mxu0 0.0
  %1211 = vmatpush1.msra.mxu0 0.0
  %1212 = vmatprep.subr.mxu0 0.0
  %1213 = vmatpush1.msra.mxu0 0.0
  %1214 = vmatprep.subr.mxu0 0.0
  %1215 = vmatpush1.msra.mxu0 0.0
  %1216 = vmatprep.subr.mxu0 0.0
  %1217 = vmatpush1.msra.mxu0 0.0
  %1218 = vmatprep.subr.mxu0 0.0
  %1219 = vmatpush1.msra.mxu0 0.0
  %1220 = vmatprep.subr.mxu0 0.0
  %1221 = vmatpush1.msra.mxu0 0.0
  %1222 = vmatprep.subr.mxu0 0.0
  %1223 = vmatpush1.msra.mxu0 0.0
  %1224 = vmatprep.subr.mxu0 0.0
  %1225 = vmatpush1.msra.mxu0 0.0
  %1226 = vmatprep.subr.mxu0 0.0
  %1227 = vmatpush1.msra.mxu0 0.0
  %1228 = vmatprep.subr.mxu0 0.0
  %1229 = vmatpush1.msra.mxu0 0.0
  %1230 = vmatprep.subr.mxu0 0.0
  %1231 = vmatpush1.msra.mxu0 0.0
  %1232 = vmatprep.subr.mxu0 0.0
  %1233 = vmatpush1.msra.mxu0 0.0
  %1234 = vmatprep.subr.mxu0 0.0
  %1235 = vmatpush1.msra.mxu0 0.0
  %1236 = vmatprep.subr.mxu0 0.0
  %1237 = vmatpush1.msra.mxu0 0.0
  %1238 = vmatprep.subr.mxu0 0.0
  %1239 = vmatpush1.msra.mxu0 0.0
  %1240 = vmatprep.subr.mxu0 0.0
  %1241 = vmatpush1.msra.mxu0 0.0
  %1242 = vmatprep.subr.mxu0 0.0
  %1243 = vmatpush1.msra.mxu0 0.0
  %1244 = vmatprep.mubr.f32.mxu0 0.0
  %1245 = vmatmul.mubr.f32.gmra.mrb[0].mxu0 %v1133
  %v1246 = vpop.f32.mrb[0].mxu0
  %v1247 = vadd.f32 %v1129, %v1246
  %v1248 = vpop.f32.mrb[0].mxu0
  %1249 = vmatprep.mubr.f32.mxu0 0.0
  %1250 = vmatmul.mubr.f32.gmra.mrb[0].mxu0 %v1136
  %v1251 = vpop.f32.mrb[0].mxu0
  %v1252 = vadd.f32 %v1129, %v1251
  %v1253 = vpop.f32.mrb[0].mxu0
  %1254 = vmatprep.mubr.f32.mxu0 0.0
  %1255 = vmatmul.mubr.f32.gmra.mrb[0].mxu0 %v1139
  %v1256 = vpop.f32.mrb[0].mxu0
  %v1257 = vadd.f32 %v1129, %v1256
  %v1258 = vpop.f32.mrb[0].mxu0
  %1259 = vmatprep.mubr.f32.mxu0 0.0
  %1260 = vmatmul.mubr.f32.gmra.mrb[0].mxu0 %v1142
  %v1261 = vpop.f32.mrb[0].mxu0
  %v1262 = vadd.f32 %v1129, %v1261
  %v1263 = vpop.f32.mrb[0].mxu0
  %1264 = vmatprep.mubr.f32.mxu0 0.0
  %1265 = vmatmul.mubr.f32.gmra.mrb[0].mxu0 %v1145
  %v1266 = vpop.f32.mrb[0].mxu0
  %v1267 = vadd.f32 %v1129, %v1266
  %v1268 = vpop.f32.mrb[0].mxu0
  %1269 = vmatprep.mubr.f32.mxu0 0.0
  %1270 = vmatmul.mubr.f32.gmra.mrb[0].mxu0 %v1148
  %v1271 = vpop.f32.mrb[0].mxu0
  %v1272 = vadd.f32 %v1129, %v1271
  %v1273 = vpop.f32.mrb[0].mxu0
  %1274 = vmatprep.mubr.f32.mxu0 0.0
  %1275 = vmatmul.mubr.f32.gmra.mrb[0].mxu0 %v1151
  %v1276 = vpop.f32.mrb[0].mxu0
  %v1277 = vadd.f32 %v1129, %v1276
  %v1278 = vpop.f32.mrb[0].mxu0
  %1279 = vmatprep.mubr.f32.mxu0 0.0
  %1280 = vmatmul.mubr.f32.gmra.mrb[0].mxu0 %v1154
  %v1281 = vpop.f32.mrb[0].mxu0
  %v1282 = vadd.f32 %v1129, %v1281
  %v1283 = vpop.f32.mrb[0].mxu0
  %1284 = vmatprep.mubr.f32.mxu0 0.0
  %1285 = vmatmul.mubr.f32.gmra.mrb[0].mxu0 %v1157
  %v1286 = vpop.f32.mrb[0].mxu0
  %v1287 = vadd.f32 %v1129, %v1286
  %v1288 = vpop.f32.mrb[0].mxu0
  %1289 = vmatprep.mubr.f32.mxu0 0.0
  %1290 = vmatmul.mubr.f32.gmra.mrb[0].mxu0 %v1160
  %v1291 = vpop.f32.mrb[0].mxu0
  %v1292 = vadd.f32 %v1129, %v1291
  %v1293 = vpop.f32.mrb[0].mxu0
  %1294 = vmatprep.mubr.f32.mxu0 0.0
  %1295 = vmatmul.mubr.f32.gmra.mrb[0].mxu0 %v1163
  %v1296 = vpop.f32.mrb[0].mxu0
  %v1297 = vadd.f32 %v1129, %v1296
  %v1298 = vpop.f32.mrb[0].mxu0
  %1299 = vmatprep.mubr.f32.mxu0 0.0
  %1300 = vmatmul.mubr.f32.gmra.mrb[0].mxu0 %v1166
  %v1301 = vpop.f32.mrb[0].mxu0
  %v1302 = vadd.f32 %v1129, %v1301
  %v1303 = vpop.f32.mrb[0].mxu0
  %1304 = vmatprep.mubr.f32.mxu0 0.0
  %1305 = vmatmul.mubr.f32.gmra.mrb[0].mxu0 %v1169
  %v1306 = vpop.f32.mrb[0].mxu0
  %v1307 = vadd.f32 %v1129, %v1306
  %v1308 = vpop.f32.mrb[0].mxu0
  %1309 = vmatprep.mubr.f32.mxu0 0.0
  %1310 = vmatmul.mubr.f32.gmra.mrb[0].mxu0 %v1172
  %v1311 = vpop.f32.mrb[0].mxu0
  %v1312 = vadd.f32 %v1129, %v1311
  %v1313 = vpop.f32.mrb[0].mxu0
  %1314 = vmatprep.mubr.f32.mxu0 0.0
  %1315 = vmatmul.mubr.f32.gmra.mrb[0].mxu0 %v1175
  %v1316 = vpop.f32.mrb[0].mxu0
  %v1317 = vadd.f32 %v1129, %v1316
  %v1318 = vpop.f32.mrb[0].mxu0
  %1319 = vmatprep.mubr.f32.mxu0 0.0
  %1320 = vmatmul.mubr.f32.gmra.mrb[0].mxu0 %v1178
  %v1321 = vpop.f32.mrb[0].mxu0
  %v1322 = vadd.f32 %v1129, %v1321
  %v1323 = vpop.f32.mrb[0].mxu0
  %1324 = vdwg.mxu0
  %v1325 = vmax.f32 %v1247, 0.0
  %v1326 = vmax.f32 %v1252, 0.0
  %v1327 = vmax.f32 %v1257, 0.0
  %v1328 = vmax.f32 %v1262, 0.0
  %v1329 = vmax.f32 %v1267, 0.0
  %v1330 = vmax.f32 %v1272, 0.0
  %v1331 = vmax.f32 %v1277, 0.0
  %v1332 = vmax.f32 %v1282, 0.0
  %v1333 = vmax.f32 %v1287, 0.0
  %v1334 = vmax.f32 %v1292, 0.0
  %v1335 = vmax.f32 %v1297, 0.0
  %v1336 = vmax.f32 %v1302, 0.0
  %v1337 = vmax.f32 %v1307, 0.0
  %v1338 = vmax.f32 %v1312, 0.0
  %v1339 = vmax.f32 %v1317, 0.0
  %v1340 = vmax.f32 %v1322, 0.0
  %v1341 = vld [vmem:[%s5] sm:$0xff]
  %v1342 = vld [vmem:[%s6] sm:$0x1]
  %v1344 = vlaneseq
  %v1345 = vshrl.u32 %v1344, 7
  %v1346 = vsub.s32 0, %v1345
  %v1347 = vrot.slane %v1342, %v1346
  %v1350 = vsel %vm263, %v1325, 0
  %v1353 = vsel %vm263, %v1326, 0
  %v1356 = vsel %vm263, %v1327, 0
  %v1359 = vsel %vm263, %v1328, 0
  %v1362 = vsel %vm263, %v1329, 0
  %v1365 = vsel %vm263, %v1330, 0
  %v1368 = vsel %vm263, %v1331, 0
  %v1371 = vsel %vm263, %v1332, 0
  %v1374 = vsel %vm263, %v1333, 0
  %v1377 = vsel %vm263, %v1334, 0
  %v1380 = vsel %vm263, %v1335, 0
  %v1383 = vsel %vm263, %v1336, 0
  %v1386 = vsel %vm263, %v1337, 0
  %v1389 = vsel %vm263, %v1338, 0
  %v1392 = vsel %vm263, %v1339, 0
  %v1395 = vsel %vm263, %v1340, 0
  %1397 = vmatprep.subr.mxu0 0.0
  %1398 = vmatpush1.msra.mxu0 %v1341
  %1399 = vmatprep.subr.mxu0 0.0
  %1400 = vmatpush1.msra.mxu0 0.0
  %1401 = vmatprep.subr.mxu0 0.0
  %1402 = vmatpush1.msra.mxu0 0.0
  %1403 = vmatprep.subr.mxu0 0.0
  %1404 = vmatpush1.msra.mxu0 0.0
  %1405 = vmatprep.subr.mxu0 0.0
  %1406 = vmatpush1.msra.mxu0 0.0
  %1407 = vmatprep.subr.mxu0 0.0
  %1408 = vmatpush1.msra.mxu0 0.0
  %1409 = vmatprep.subr.mxu0 0.0
  %1410 = vmatpush1.msra.mxu0 0.0
  %1411 = vmatprep.subr.mxu0 0.0
  %1412 = vmatpush1.msra.mxu0 0.0
  %1413 = vmatprep.subr.mxu0 0.0
  %1414 = vmatpush1.msra.mxu0 0.0
  %1415 = vmatprep.subr.mxu0 0.0
  %1416 = vmatpush1.msra.mxu0 0.0
  %1417 = vmatprep.subr.mxu0 0.0
  %1418 = vmatpush1.msra.mxu0 0.0
  %1419 = vmatprep.subr.mxu0 0.0
  %1420 = vmatpush1.msra.mxu0 0.0
  %1421 = vmatprep.subr.mxu0 0.0
  %1422 = vmatpush1.msra.mxu0 0.0
  %1423 = vmatprep.subr.mxu0 0.0
  %1424 = vmatpush1.msra.mxu0 0.0
  %1425 = vmatprep.subr.mxu0 0.0
  %1426 = vmatpush1.msra.mxu0 0.0
  %1427 = vmatprep.subr.mxu0 0.0
  %1428 = vmatpush1.msra.mxu0 0.0
  %1429 = vmatprep.subr.mxu0 0.0
  %1430 = vmatpush1.msra.mxu0 0.0
  %1431 = vmatprep.subr.mxu0 0.0
  %1432 = vmatpush1.msra.mxu0 0.0
  %1433 = vmatprep.subr.mxu0 0.0
  %1434 = vmatpush1.msra.mxu0 0.0
  %1435 = vmatprep.subr.mxu0 0.0
  %1436 = vmatpush1.msra.mxu0 0.0
  %1437 = vmatprep.subr.mxu0 0.0
  %1438 = vmatpush1.msra.mxu0 0.0
  %1439 = vmatprep.subr.mxu0 0.0
  %1440 = vmatpush1.msra.mxu0 0.0
  %1441 = vmatprep.subr.mxu0 0.0
  %1442 = vmatpush1.msra.mxu0 0.0
  %1443 = vmatprep.subr.mxu0 0.0
  %1444 = vmatpush1.msra.mxu0 0.0
  %1445 = vmatprep.subr.mxu0 0.0
  %1446 = vmatpush1.msra.mxu0 0.0
  %1447 = vmatprep.subr.mxu0 0.0
  %1448 = vmatpush1.msra.mxu0 0.0
  %1449 = vmatprep.subr.mxu0 0.0
  %1450 = vmatpush1.msra.mxu0 0.0
  %1451 = vmatprep.subr.mxu0 0.0
  %1452 = vmatpush1.msra.mxu0 0.0
  %1453 = vmatprep.subr.mxu0 0.0
  %1454 = vmatpush1.msra.mxu0 0.0
  %1455 = vmatprep.subr.mxu0 0.0
  %1456 = vmatpush1.msra.mxu0 0.0
  %1457 = vmatprep.subr.mxu0 0.0
  %1458 = vmatpush1.msra.mxu0 0.0
  %1459 = vmatprep.subr.mxu0 0.0
  %1460 = vmatpush1.msra.mxu0 0.0
  %1461 = vmatprep.mubr.f32.mxu0 0.0
  %1462 = vmatmul.mubr.f32.gmra.mrb[0].mxu0 %v1350
  %v1463 = vpop.f32.mrb[0].mxu0
  %v1464 = vadd.f32 %v1347, %v1463
  %v1465 = vpop.f32.mrb[0].mxu0
  %1466 = vmatprep.mubr.f32.mxu0 0.0
  %1467 = vmatmul.mubr.f32.gmra.mrb[0].mxu0 %v1353
  %v1468 = vpop.f32.mrb[0].mxu0
  %v1469 = vadd.f32 %v1347, %v1468
  %v1470 = vpop.f32.mrb[0].mxu0
  %1471 = vmatprep.mubr.f32.mxu0 0.0
  %1472 = vmatmul.mubr.f32.gmra.mrb[0].mxu0 %v1356
  %v1473 = vpop.f32.mrb[0].mxu0
  %v1474 = vadd.f32 %v1347, %v1473
  %v1475 = vpop.f32.mrb[0].mxu0
  %1476 = vmatprep.mubr.f32.mxu0 0.0
  %1477 = vmatmul.mubr.f32.gmra.mrb[0].mxu0 %v1359
  %v1478 = vpop.f32.mrb[0].mxu0
  %v1479 = vadd.f32 %v1347, %v1478
  %v1480 = vpop.f32.mrb[0].mxu0
  %1481 = vmatprep.mubr.f32.mxu0 0.0
  %1482 = vmatmul.mubr.f32.gmra.mrb[0].mxu0 %v1362
  %v1483 = vpop.f32.mrb[0].mxu0
  %v1484 = vadd.f32 %v1347, %v1483
  %v1485 = vpop.f32.mrb[0].mxu0
  %1486 = vmatprep.mubr.f32.mxu0 0.0
  %1487 = vmatmul.mubr.f32.gmra.mrb[0].mxu0 %v1365
  %v1488 = vpop.f32.mrb[0].mxu0
  %v1489 = vadd.f32 %v1347, %v1488
  %v1490 = vpop.f32.mrb[0].mxu0
  %1491 = vmatprep.mubr.f32.mxu0 0.0
  %1492 = vmatmul.mubr.f32.gmra.mrb[0].mxu0 %v1368
  %v1493 = vpop.f32.mrb[0].mxu0
  %v1494 = vadd.f32 %v1347, %v1493
  %v1495 = vpop.f32.mrb[0].mxu0
  %1496 = vmatprep.mubr.f32.mxu0 0.0
  %1497 = vmatmul.mubr.f32.gmra.mrb[0].mxu0 %v1371
  %v1498 = vpop.f32.mrb[0].mxu0
  %v1499 = vadd.f32 %v1347, %v1498
  %v1500 = vpop.f32.mrb[0].mxu0
  %1501 = vmatprep.mubr.f32.mxu0 0.0
  %1502 = vmatmul.mubr.f32.gmra.mrb[0].mxu0 %v1374
  %v1503 = vpop.f32.mrb[0].mxu0
  %v1504 = vadd.f32 %v1347, %v1503
  %v1505 = vpop.f32.mrb[0].mxu0
  %1506 = vmatprep.mubr.f32.mxu0 0.0
  %1507 = vmatmul.mubr.f32.gmra.mrb[0].mxu0 %v1377
  %v1508 = vpop.f32.mrb[0].mxu0
  %v1509 = vadd.f32 %v1347, %v1508
  %v1510 = vpop.f32.mrb[0].mxu0
  %1511 = vmatprep.mubr.f32.mxu0 0.0
  %1512 = vmatmul.mubr.f32.gmra.mrb[0].mxu0 %v1380
  %v1513 = vpop.f32.mrb[0].mxu0
  %v1514 = vadd.f32 %v1347, %v1513
  %v1515 = vpop.f32.mrb[0].mxu0
  %1516 = vmatprep.mubr.f32.mxu0 0.0
  %1517 = vmatmul.mubr.f32.gmra.mrb[0].mxu0 %v1383
  %v1518 = vpop.f32.mrb[0].mxu0
  %v1519 = vadd.f32 %v1347, %v1518
  %v1520 = vpop.f32.mrb[0].mxu0
  %1521 = vmatprep.mubr.f32.mxu0 0.0
  %1522 = vmatmul.mubr.f32.gmra.mrb[0].mxu0 %v1386
  %v1523 = vpop.f32.mrb[0].mxu0
  %v1524 = vadd.f32 %v1347, %v1523
  %v1525 = vpop.f32.mrb[0].mxu0
  %1526 = vmatprep.mubr.f32.mxu0 0.0
  %1527 = vmatmul.mubr.f32.gmra.mrb[0].mxu0 %v1389
  %v1528 = vpop.f32.mrb[0].mxu0
  %v1529 = vadd.f32 %v1347, %v1528
  %v1530 = vpop.f32.mrb[0].mxu0
  %1531 = vmatprep.mubr.f32.mxu0 0.0
  %1532 = vmatmul.mubr.f32.gmra.mrb[0].mxu0 %v1392
  %v1533 = vpop.f32.mrb[0].mxu0
  %v1534 = vadd.f32 %v1347, %v1533
  %v1535 = vpop.f32.mrb[0].mxu0
  %1536 = vmatprep.mubr.f32.mxu0 0.0
  %1537 = vmatmul.mubr.f32.gmra.mrb[0].mxu0 %v1395
  %v1538 = vpop.f32.mrb[0].mxu0
  %v1539 = vadd.f32 %v1347, %v1538
  %v1540 = vpop.f32.mrb[0].mxu0
  %1541 = vdwg.mxu0
  %v1542 = vadd.f32 %v1464, %v26
  %v1543 = vadd.f32 %v1469, %v27
  %v1544 = vadd.f32 %v1474, %v28
  %v1545 = vadd.f32 %v1479, %v29
  %v1546 = vadd.f32 %v1484, %v30
  %v1547 = vadd.f32 %v1489, %v31
  %v1548 = vadd.f32 %v1494, %v32
  %v1549 = vadd.f32 %v1499, %v33
  %v1550 = vadd.f32 %v1504, %v34
  %v1551 = vadd.f32 %v1509, %v35
  %v1552 = vadd.f32 %v1514, %v36
  %v1553 = vadd.f32 %v1519, %v37
  %v1554 = vadd.f32 %v1524, %v38
  %v1555 = vadd.f32 %v1529, %v39
  %v1556 = vadd.f32 %v1534, %v40
  %v1557 = vadd.f32 %v1539, %v41
  %v1558 = vmax.f32 %v1542, 0.0
  %v1559 = vmax.f32 %v1543, 0.0
  %v1560 = vmax.f32 %v1544, 0.0
  %v1561 = vmax.f32 %v1545, 0.0
  %v1562 = vmax.f32 %v1546, 0.0
  %v1563 = vmax.f32 %v1547, 0.0
  %v1564 = vmax.f32 %v1548, 0.0
  %v1565 = vmax.f32 %v1549, 0.0
  %v1566 = vmax.f32 %v1550, 0.0
  %v1567 = vmax.f32 %v1551, 0.0
  %v1568 = vmax.f32 %v1552, 0.0
  %v1569 = vmax.f32 %v1553, 0.0
  %v1570 = vmax.f32 %v1554, 0.0
  %v1571 = vmax.f32 %v1555, 0.0
  %v1572 = vmax.f32 %v1556, 0.0
  %v1573 = vmax.f32 %v1557, 0.0
  %1574 = vst.msk [vmem:[%s7] sm:$0xff] %vm53, %v1558
  %1575 = vst.msk [vmem:[%s7 + $0x8] sm:$0xff] %vm53, %v1559
  %1576 = vst.msk [vmem:[%s7 + $0x10] sm:$0xff] %vm53, %v1560
  %1577 = vst.msk [vmem:[%s7 + $0x18] sm:$0xff] %vm53, %v1561
  %1578 = vst.msk [vmem:[%s7 + $0x20] sm:$0xff] %vm53, %v1562
  %1579 = vst.msk [vmem:[%s7 + $0x28] sm:$0xff] %vm53, %v1563
  %1580 = vst.msk [vmem:[%s7 + $0x30] sm:$0xff] %vm53, %v1564
  %1581 = vst.msk [vmem:[%s7 + $0x38] sm:$0xff] %vm53, %v1565
  %1582 = vst.msk [vmem:[%s7 + $0x40] sm:$0xff] %vm53, %v1566
  %1583 = vst.msk [vmem:[%s7 + $0x48] sm:$0xff] %vm53, %v1567
  %1584 = vst.msk [vmem:[%s7 + $0x50] sm:$0xff] %vm53, %v1568
  %1585 = vst.msk [vmem:[%s7 + $0x58] sm:$0xff] %vm53, %v1569
  %1586 = vst.msk [vmem:[%s7 + $0x60] sm:$0xff] %vm53, %v1570
  %1587 = vst.msk [vmem:[%s7 + $0x68] sm:$0xff] %vm53, %v1571
  %1588 = vst.msk [vmem:[%s7 + $0x70] sm:$0xff] %vm53, %v1572
  %1589 = vst.msk [vmem:[%s7 + $0x78] sm:$0xff] %vm53, %v1573
  // Predicated region
  $region30: #{tpu_custom_call.1} parent=0 // pred_check
    _
  $region31: #{tpu_custom_call.1} parent=0 // pred_check_branch
    %1591 = sbr.rel (0) target = $region33
  $region32: #{tpu_custom_call.1} parent=0 // pred_region
    _
  $region33: #{tpu_custom_call.1} parent=0 // pred_fallthru
    _
  // Predicated region
  $region34: #{tpu_custom_call.1} parent=0 // pred_check
    _
  $region35: #{tpu_custom_call.1} parent=0 // pred_check_branch
    %1593 = sbr.rel (0) target = $region37
  $region36: #{tpu_custom_call.1} parent=0 // pred_region
    _
  $region37: #{tpu_custom_call.1} parent=0 // pred_fallthru
    _

</llo_original>
